<compile_context>
chip_gen: v6e
topology: v6e:2x2x1
jax: 0.10.0
libtpu: 0.0.40
codegen_flags: <defaults>
</compile_context>

<pallas_src>
import jax
import jax.numpy as jnp
from jax.experimental import pallas as pl
from jax.experimental.pallas import tpu as pltpu


# ----------------------------------------------------------------------------- kernel
def ptcorr_kernel(w1z_ref, xf_ref,
                  b1_ref, w2_ref, b2_ref, w3_ref, b3_ref,
                  fc1wt_ref, fc1b_ref, fc2w_ref, fc2b_ref,
                  out_ref):
    """One grid step == one batch element.

    w1z_ref : (MID, C)  bf16  -- fused (folded conv1 weight) @ (reference kernel)^T
    xf_ref  : (C, HW)   bf16  -- search features, spatial flattened on lanes
    b1      : (MID, 1)  f32   folded conv+BN #1 bias
    w2/b2   : (MID, MID) bf16 / (MID, 1) f32   folded conv+BN #2
    w3/b3   : (K, MID)  bf16 / (K, 1)  f32     folded conv+BN #3
    fc1wT   : (K, K//4) f32   SE squeeze weight, pre-transposed
    fc1b    : (1, K//4) f32
    fc2w    : (K, K//4) f32   SE excite weight (natural layout)
    fc2b    : (K, 1)    f32
    out     : (K, HW)   f32
    """
    # --- fused correlation + conv1 + BN + ReLU (bf16 MXU, f32 accumulate) ---
    y = jnp.dot(w1z_ref[...], xf_ref[...],
                preferred_element_type=jnp.float32) + b1_ref[...]
    y = jnp.maximum(y, 0.0)                                             # (MID, HW) f32

    # --- conv2 + BN + ReLU ---
    y = jnp.dot(w2_ref[...], y.astype(jnp.bfloat16),
                preferred_element_type=jnp.float32) + b2_ref[...]
    y = jnp.maximum(y, 0.0)                                             # (MID, HW)

    # --- conv3 + BN + ReLU ---
    y = jnp.dot(w3_ref[...], y.astype(jnp.bfloat16),
                preferred_element_type=jnp.float32) + b3_ref[...]
    y = jnp.maximum(y, 0.0)                                             # (K, HW)

    # --- SE channel attention, kept off the MXU (VPU mul + XLU reduce + EUP sigmoid) ---
    avg = jnp.mean(y, axis=1, keepdims=True)                            # (K, 1)
    s = jnp.sum(fc1wt_ref[...] * avg, axis=0, keepdims=True) + fc1b_ref[...]   # (1, K//4)
    s = jnp.maximum(s, 0.0)
    s = jnp.sum(fc2w_ref[...] * s, axis=1, keepdims=True) + fc2b_ref[...]      # (K, 1)
    s = jax.nn.sigmoid(s)

    out_ref[...] = y * s                                                # (K, HW) f32


# ----------------------------------------------------------------------------- wrapper
def ptcorr_forward(zf, xf, params):
    """zf: (b, C, 7, 7)  xf: (b, C, H, W)  ->  (b, 49, H, W)  (float32, NCHW)."""
    b, c, hz, wz = zf.shape
    _, _, h, w = xf.shape
    K = hz * wz
    HW = h * w

    (w1, b1, w2, b2, w3, b3, fc1w, fc1b, fc2w, fc2b) = params
    mid = w1.shape[0]

    zf_flat = zf.reshape(b, c, K).transpose(0, 2, 1)        # (b, K, C)  == ker
    xf_flat = xf.reshape(b, c, HW)                          # (b, C, HW)

    # Algebraic fusion of correlation into conv1 (valid: ReLU only appears after conv1).
    w1z = jnp.einsum('ok,bkc->boc', w1, zf_flat)            # (b, MID, C) f32, tiny
    w1z_bf = w1z.astype(jnp.bfloat16)
    xf_bf = xf_flat.astype(jnp.bfloat16)
    w2_bf = w2.astype(jnp.bfloat16)
    w3_bf = w3.astype(jnp.bfloat16)

    # SE weights laid out so the tail is pure VPU/XLU (no 1-lane-wide MXU results).
    fc1wT = fc1w.T                                          # (K, K//4)
    fc1b_row = fc1b.reshape(1, -1)                          # (1, K//4)
    fc2b_col = fc2b.reshape(-1, 1)                          # (K, 1)

    def _full(x):
        rank = x.ndim
        return pl.BlockSpec(x.shape, lambda i, _r=rank: (0,) * _r)

    out = pl.pallas_call(
        ptcorr_kernel,
        out_shape=jax.ShapeDtypeStruct((b, K, HW), jnp.float32),
        grid_spec=pltpu.PrefetchScalarGridSpec(
            num_scalar_prefetch=0,
            grid=(b,),
            in_specs=[
                pl.BlockSpec((None, mid, c), lambda i: (i, 0, 0)),   # w1z  (per batch)
                pl.BlockSpec((None, c, HW), lambda i: (i, 0, 0)),    # xf   (per batch)
                _full(b1),                                            # shared weights:
                _full(w2_bf), _full(b2),                              # constant index map
                _full(w3_bf), _full(b3),                              # -> kept resident,
                _full(fc1wT), _full(fc1b_row),                        #    not re-DMA'd
                _full(fc2w), _full(fc2b_col),                         #    per grid step
            ],
            out_specs=pl.BlockSpec((None, K, HW), lambda i: (i, 0, 0)),
        ),
        compiler_params=pltpu.CompilerParams(
            # Keep a b-wide parallel axis: on v7x each TensorCore takes one batch
            # element; on single-TC v5e/v6e the extra step is ~0.35us of overhead.
            dimension_semantics=("parallel",)),
    )(w1z_bf, xf_bf, b1, w2_bf, b2, w3_bf, b3, fc1wT, fc1b_row, fc2w, fc2b_col)

    return out.reshape(b, K, h, w)


# ----------------------------------------------------------------------------- params
def _fold_conv_bn(w, b, gamma, beta, rm, rv, eps=1e-5):
    """Fold eval-mode BatchNorm into a 1x1 conv: y = relu(W' x + b')."""
    scale = gamma / jnp.sqrt(rv + eps)
    w_f = w * scale[:, None]
    b_f = (b - rm) * scale + beta
    return w_f.astype(jnp.float32), b_f[:, None].astype(jnp.float32)


def init_params(key, pool_size=7, reduction=4, mid=128):
    K = pool_size * pool_size            # 49 correlation channels
    red = K // reduction                 # 12

    def conv_bn(key, c_out, c_in):
        ks = jax.random.split(key, 6)
        w = jax.random.normal(ks[0], (c_out, c_in), jnp.float32) * 0.05
        b = jax.random.normal(ks[1], (c_out,), jnp.float32) * 0.05
        gamma = 1.0 + 0.1 * jax.random.normal(ks[2], (c_out,), jnp.float32)
        beta = 0.1 * jax.random.normal(ks[3], (c_out,), jnp.float32)
        rm = 0.1 * jax.random.normal(ks[4], (c_out,), jnp.float32)
        rv = 0.5 + jnp.abs(jax.random.normal(ks[5], (c_out,), jnp.float32))
        return _fold_conv_bn(w, b, gamma, beta, rm, rv)

    k1, k2, k3, k4, k5 = jax.random.split(key, 5)
    w1, b1 = conv_bn(k1, mid, K)         # 49 -> 128
    w2, b2 = conv_bn(k2, mid, mid)       # 128 -> 128
    w3, b3 = conv_bn(k3, K, mid)         # 128 -> 49

    ks = jax.random.split(k4, 2)
    fc1w = jax.random.normal(ks[0], (red, K), jnp.float32) * 0.05
    fc1b = 0.05 * jax.random.normal(ks[1], (red,), jnp.float32)
    ks = jax.random.split(k5, 2)
    fc2w = jax.random.normal(ks[0], (K, red), jnp.float32) * 0.05
    fc2b = 0.05 * jax.random.normal(ks[1], (K,), jnp.float32)

    return (w1, b1, w2, b2, w3, b3, fc1w, fc1b, fc2w, fc2b)


# ----------------------------------------------------------------------------- reference (pure f32 JAX, unfused)
def ptcorr_reference(zf, xf, params):
    b, c, hz, wz = zf.shape
    _, _, h, w = xf.shape
    K, HW = hz * wz, h * w
    (w1, b1, w2, b2, w3, b3, fc1w, fc1b, fc2w, fc2b) = params

    ker = zf.reshape(b, c, K).transpose(0, 2, 1)           # (b, K, C)
    feat = xf.reshape(b, c, HW)                            # (b, C, HW)
    corr = jnp.einsum('bkc,bcs->bks', ker, feat)           # (b, K, HW)

    y = jnp.maximum(jnp.einsum('oc,bcs->bos', w1, corr) + b1[None], 0.0)
    y = jnp.maximum(jnp.einsum('oc,bcs->bos', w2, y) + b2[None], 0.0)
    y = jnp.maximum(jnp.einsum('oc,bcs->bos', w3, y) + b3[None], 0.0)

    avg = jnp.mean(y, axis=2, keepdims=True)               # (b, K, 1)
    s = jnp.maximum(jnp.einsum('rk,bkx->brx', fc1w, avg) + fc1b[None, :, None], 0.0)
    s = jax.nn.sigmoid(jnp.einsum('kr,brx->bkx', fc2w, s) + fc2b[None, :, None])
    return (y * s).reshape(b, K, h, w)


# ----------------------------------------------------------------------------- main
if __name__ == "__main__":
    key = jax.random.PRNGKey(0)
    k_zf, k_xf, k_p = jax.random.split(key, 3)

    B, C, H, W = 2, 32, 16, 16       # small search features (HW = 256, lane-dense)
    POOL = 7                         # zf spatial = 7x7 -> 49 corr channels

    zf = jax.random.normal(k_zf, (B, C, POOL, POOL), jnp.float32)
    xf = jax.random.normal(k_xf, (B, C, H, W), jnp.float32)
    params = init_params(k_p, pool_size=POOL)

    out = ptcorr_forward(zf, xf, params)
    out = jax.block_until_ready(out)

    ref = jax.block_until_ready(ptcorr_reference(zf, xf, params))
    assert out.shape == (B, POOL * POOL, H, W)
    # bf16 MXU operands (f32 accumulate) change numerics by < ~1e-2 absolute at these
    # scales vs. the pure-f32 reference; tolerance reflects that, still catches bugs.
    assert jnp.allclose(out, ref, atol=3e-2, rtol=3e-2), "mismatch vs JAX reference"

    print("KERNEL_OK")
</pallas_src>

<mosaic_0001>
module attributes {stable_mosaic.version = 11 : i64} {
  func.func @ptcorr_kernel(%arg0: i32, %arg1: memref<1x128x32xbf16, #tpu.memory_space<vmem>>, %arg2: memref<1x32x256xbf16, #tpu.memory_space<vmem>>, %arg3: memref<128x1xf32, #tpu.memory_space<vmem>>, %arg4: memref<128x128xbf16, #tpu.memory_space<vmem>>, %arg5: memref<128x1xf32, #tpu.memory_space<vmem>>, %arg6: memref<49x128xbf16, #tpu.memory_space<vmem>>, %arg7: memref<49x1xf32, #tpu.memory_space<vmem>>, %arg8: memref<49x12xf32, #tpu.memory_space<vmem>>, %arg9: memref<1x12xf32, #tpu.memory_space<vmem>>, %arg10: memref<49x12xf32, #tpu.memory_space<vmem>>, %arg11: memref<49x1xf32, #tpu.memory_space<vmem>>, %arg12: memref<1x49x256xf32, #tpu.memory_space<vmem>>) attributes {dimension_semantics = [#tpu.dimension_semantics<parallel>], iteration_bounds = array<i64: 2>, scalar_prefetch = 0 : i64, scratch_operands = 0 : i64, tpu.core_type = #tpu.core_type<tc>, window_params = [{transform_indices = @transform_0, window_bounds = array<i64: 1, 128, 32>}, {transform_indices = @transform_1, window_bounds = array<i64: 1, 32, 256>}, {pipeline_mode = #tpu.pipeline_mode<synchronous>, transform_indices = @transform_2, window_bounds = array<i64: 128, 1>}, {pipeline_mode = #tpu.pipeline_mode<synchronous>, transform_indices = @transform_3, window_bounds = array<i64: 128, 128>}, {pipeline_mode = #tpu.pipeline_mode<synchronous>, transform_indices = @transform_4, window_bounds = array<i64: 128, 1>}, {pipeline_mode = #tpu.pipeline_mode<synchronous>, transform_indices = @transform_5, window_bounds = array<i64: 49, 128>}, {pipeline_mode = #tpu.pipeline_mode<synchronous>, transform_indices = @transform_6, window_bounds = array<i64: 49, 1>}, {pipeline_mode = #tpu.pipeline_mode<synchronous>, transform_indices = @transform_7, window_bounds = array<i64: 49, 12>}, {pipeline_mode = #tpu.pipeline_mode<synchronous>, transform_indices = @transform_8, window_bounds = array<i64: 1, 12>}, {pipeline_mode = #tpu.pipeline_mode<synchronous>, transform_indices = @transform_9, window_bounds = array<i64: 49, 12>}, {pipeline_mode = #tpu.pipeline_mode<synchronous>, transform_indices = @transform_10, window_bounds = array<i64: 49, 1>}, {transform_indices = @transform_11, window_bounds = array<i64: 1, 49, 256>}]} {
    %c0 = arith.constant 0 : index
    %c0_0 = arith.constant 0 : index
    %c0_1 = arith.constant 0 : index
    %0 = vector.load %arg1[%c0, %c0_0, %c0_1] : memref<1x128x32xbf16, #tpu.memory_space<vmem>>, vector<1x128x32xbf16>
    %1 = vector.shape_cast %0 : vector<1x128x32xbf16> to vector<128x32xbf16>
    %c0_2 = arith.constant 0 : index
    %c0_3 = arith.constant 0 : index
    %c0_4 = arith.constant 0 : index
    %2 = vector.load %arg2[%c0_2, %c0_3, %c0_4] : memref<1x32x256xbf16, #tpu.memory_space<vmem>>, vector<1x32x256xbf16>
    %3 = vector.shape_cast %2 : vector<1x32x256xbf16> to vector<32x256xbf16>
    %cst = arith.constant dense<0.000000e+00> : vector<128x256xf32>
    %4 = tpu.matmul %1, %3, %cst {dimension_numbers = #tpu.dot_dimension_numbers<[1], [0], [0], [1], [0, 0, 1, 1], [], []>} : vector<128x32xbf16>, vector<32x256xbf16>, vector<128x256xf32> -> vector<128x256xf32>
    %c0_5 = arith.constant 0 : index
    %c0_6 = arith.constant 0 : index
    %5 = vector.load %arg3[%c0_5, %c0_6] : memref<128x1xf32, #tpu.memory_space<vmem>>, vector<128x1xf32>
    %6 = vector.broadcast %5 : vector<128x1xf32> to vector<128x256xf32>
    %7 = arith.addf %4, %6 : vector<128x256xf32>
    %cst_7 = arith.constant 0.000000e+00 : f32
    %8 = vector.broadcast %cst_7 : f32 to vector<128x256xf32>
    %9 = arith.maximumf %7, %8 : vector<128x256xf32>
    %c0_8 = arith.constant 0 : index
    %c0_9 = arith.constant 0 : index
    %10 = vector.load %arg4[%c0_8, %c0_9] : memref<128x128xbf16, #tpu.memory_space<vmem>>, vector<128x128xbf16>
    %11 = arith.truncf %9 : vector<128x256xf32> to vector<128x256xbf16>
    %cst_10 = arith.constant dense<0.000000e+00> : vector<128x256xf32>
    %12 = tpu.matmul %10, %11, %cst_10 {dimension_numbers = #tpu.dot_dimension_numbers<[1], [0], [0], [1], [0, 0, 1, 1], [], []>} : vector<128x128xbf16>, vector<128x256xbf16>, vector<128x256xf32> -> vector<128x256xf32>
    %c0_11 = arith.constant 0 : index
    %c0_12 = arith.constant 0 : index
    %13 = vector.load %arg5[%c0_11, %c0_12] : memref<128x1xf32, #tpu.memory_space<vmem>>, vector<128x1xf32>
    %14 = vector.broadcast %13 : vector<128x1xf32> to vector<128x256xf32>
    %15 = arith.addf %12, %14 : vector<128x256xf32>
    %cst_13 = arith.constant 0.000000e+00 : f32
    %16 = vector.broadcast %cst_13 : f32 to vector<128x256xf32>
    %17 = arith.maximumf %15, %16 : vector<128x256xf32>
    %c0_14 = arith.constant 0 : index
    %c0_15 = arith.constant 0 : index
    %18 = vector.load %arg6[%c0_14, %c0_15] : memref<49x128xbf16, #tpu.memory_space<vmem>>, vector<49x128xbf16>
    %19 = arith.truncf %17 : vector<128x256xf32> to vector<128x256xbf16>
    %cst_16 = arith.constant dense<0.000000e+00> : vector<49x256xf32>
    %20 = tpu.matmul %18, %19, %cst_16 {dimension_numbers = #tpu.dot_dimension_numbers<[1], [0], [0], [1], [0, 0, 1, 1], [], []>} : vector<49x128xbf16>, vector<128x256xbf16>, vector<49x256xf32> -> vector<49x256xf32>
    %c0_17 = arith.constant 0 : index
    %c0_18 = arith.constant 0 : index
    %21 = vector.load %arg7[%c0_17, %c0_18] : memref<49x1xf32, #tpu.memory_space<vmem>>, vector<49x1xf32>
    %22 = vector.broadcast %21 : vector<49x1xf32> to vector<49x256xf32>
    %23 = arith.addf %20, %22 : vector<49x256xf32>
    %cst_19 = arith.constant 0.000000e+00 : f32
    %24 = vector.broadcast %cst_19 : f32 to vector<49x256xf32>
    %25 = arith.maximumf %23, %24 : vector<49x256xf32>
    %cst_20 = arith.constant dense<0.000000e+00> : vector<49xf32>
    %26 = vector.multi_reduction <add>, %25, %cst_20 [1] : vector<49x256xf32> to vector<49xf32>
    %27 = vector.shape_cast %26 : vector<49xf32> to vector<49x1xf32>
    %cst_21 = arith.constant 2.560000e+02 : f32
    %28 = vector.broadcast %cst_21 : f32 to vector<49x1xf32>
    %29 = arith.divf %27, %28 : vector<49x1xf32>
    %c0_22 = arith.constant 0 : index
    %c0_23 = arith.constant 0 : index
    %30 = vector.load %arg8[%c0_22, %c0_23] : memref<49x12xf32, #tpu.memory_space<vmem>>, vector<49x12xf32>
    %31 = vector.broadcast %29 : vector<49x1xf32> to vector<49x12xf32>
    %32 = arith.mulf %30, %31 : vector<49x12xf32>
    %cst_24 = arith.constant dense<0.000000e+00> : vector<12xf32>
    %33 = vector.multi_reduction <add>, %32, %cst_24 [0] : vector<49x12xf32> to vector<12xf32>
    %34 = vector.shape_cast %33 : vector<12xf32> to vector<1x12xf32>
    %c0_25 = arith.constant 0 : index
    %c0_26 = arith.constant 0 : index
    %35 = vector.load %arg9[%c0_25, %c0_26] : memref<1x12xf32, #tpu.memory_space<vmem>>, vector<1x12xf32>
    %36 = arith.addf %34, %35 : vector<1x12xf32>
    %cst_27 = arith.constant 0.000000e+00 : f32
    %37 = vector.broadcast %cst_27 : f32 to vector<1x12xf32>
    %38 = arith.maximumf %36, %37 : vector<1x12xf32>
    %c0_28 = arith.constant 0 : index
    %c0_29 = arith.constant 0 : index
    %39 = vector.load %arg10[%c0_28, %c0_29] : memref<49x12xf32, #tpu.memory_space<vmem>>, vector<49x12xf32>
    %40 = vector.broadcast %38 : vector<1x12xf32> to vector<49x12xf32>
    %41 = arith.mulf %39, %40 : vector<49x12xf32>
    %cst_30 = arith.constant dense<0.000000e+00> : vector<49xf32>
    %42 = vector.multi_reduction <add>, %41, %cst_30 [1] : vector<49x12xf32> to vector<49xf32>
    %43 = vector.shape_cast %42 : vector<49xf32> to vector<49x1xf32>
    %c0_31 = arith.constant 0 : index
    %c0_32 = arith.constant 0 : index
    %44 = vector.load %arg11[%c0_31, %c0_32] : memref<49x1xf32, #tpu.memory_space<vmem>>, vector<49x1xf32>
    %45 = arith.addf %43, %44 : vector<49x1xf32>
    %46 = arith.negf %45 : vector<49x1xf32>
    %47 = math.exp %46 : vector<49x1xf32>
    %cst_33 = arith.constant 1.000000e+00 : f32
    %48 = vector.broadcast %cst_33 : f32 to vector<49x1xf32>
    %49 = arith.addf %48, %47 : vector<49x1xf32>
    %50 = arith.divf %48, %49 : vector<49x1xf32>
    %51 = vector.broadcast %50 : vector<49x1xf32> to vector<49x256xf32>
    %52 = arith.mulf %25, %51 : vector<49x256xf32>
    %c0_34 = arith.constant 0 : index
    %c0_35 = arith.constant 0 : index
    %c0_36 = arith.constant 0 : index
    %53 = vector.load %arg12[%c0_34, %c0_35, %c0_36] : memref<1x49x256xf32, #tpu.memory_space<vmem>>, vector<1x49x256xf32>
    %54 = vector.shape_cast %53 : vector<1x49x256xf32> to vector<49x256xf32>
    %55 = vector.shape_cast %52 : vector<49x256xf32> to vector<1x49x256xf32>
    tpu.vector_store %arg12[%c0_34, %c0_35, %c0_36], %55 {strides = array<i32>} : memref<1x49x256xf32, #tpu.memory_space<vmem>>, vector<1x49x256xf32>,
    return
  }
  func.func @transform_0(%arg0: i32) -> (i32, i32, i32) {
    %c0_i32 = arith.constant 0 : i32
    %c0_i32_0 = arith.constant 0 : i32
    %c0_i32_1 = arith.constant 0 : i32
    return %arg0, %c0_i32, %c0_i32_0 : i32, i32, i32
  }
  func.func @transform_1(%arg0: i32) -> (i32, i32, i32) {
    %c0_i32 = arith.constant 0 : i32
    %c0_i32_0 = arith.constant 0 : i32
    %c0_i32_1 = arith.constant 0 : i32
    return %arg0, %c0_i32, %c0_i32_0 : i32, i32, i32
  }
  func.func @transform_2(%arg0: i32) -> (i32, i32) {
    %c0_i32 = arith.constant 0 : i32
    %c0_i32_0 = arith.constant 0 : i32
    %c0_i32_1 = arith.constant 0 : i32
    return %c0_i32, %c0_i32_0 : i32, i32
  }
  func.func @transform_3(%arg0: i32) -> (i32, i32) {
    %c0_i32 = arith.constant 0 : i32
    %c0_i32_0 = arith.constant 0 : i32
    %c0_i32_1 = arith.constant 0 : i32
    return %c0_i32, %c0_i32_0 : i32, i32
  }
  func.func @transform_4(%arg0: i32) -> (i32, i32) {
    %c0_i32 = arith.constant 0 : i32
    %c0_i32_0 = arith.constant 0 : i32
    %c0_i32_1 = arith.constant 0 : i32
    return %c0_i32, %c0_i32_0 : i32, i32
  }
  func.func @transform_5(%arg0: i32) -> (i32, i32) {
    %c0_i32 = arith.constant 0 : i32
    %c0_i32_0 = arith.constant 0 : i32
    %c0_i32_1 = arith.constant 0 : i32
    return %c0_i32, %c0_i32_0 : i32, i32
  }
  func.func @transform_6(%arg0: i32) -> (i32, i32) {
    %c0_i32 = arith.constant 0 : i32
    %c0_i32_0 = arith.constant 0 : i32
    %c0_i32_1 = arith.constant 0 : i32
    return %c0_i32, %c0_i32_0 : i32, i32
  }
  func.func @transform_7(%arg0: i32) -> (i32, i32) {
    %c0_i32 = arith.constant 0 : i32
    %c0_i32_0 = arith.constant 0 : i32
    %c0_i32_1 = arith.constant 0 : i32
    return %c0_i32, %c0_i32_0 : i32, i32
  }
  func.func @transform_8(%arg0: i32) -> (i32, i32) {
    %c0_i32 = arith.constant 0 : i32
    %c0_i32_0 = arith.constant 0 : i32
    %c0_i32_1 = arith.constant 0 : i32
    return %c0_i32, %c0_i32_0 : i32, i32
  }
  func.func @transform_9(%arg0: i32) -> (i32, i32) {
    %c0_i32 = arith.constant 0 : i32
    %c0_i32_0 = arith.constant 0 : i32
    %c0_i32_1 = arith.constant 0 : i32
    return %c0_i32, %c0_i32_0 : i32, i32
  }
  func.func @transform_10(%arg0: i32) -> (i32, i32) {
    %c0_i32 = arith.constant 0 : i32
    %c0_i32_0 = arith.constant 0 : i32
    %c0_i32_1 = arith.constant 0 : i32
    return %c0_i32, %c0_i32_0 : i32, i32
  }
  func.func @transform_11(%arg0: i32) -> (i32, i32, i32) {
    %c0_i32 = arith.constant 0 : i32
    %c0_i32_0 = arith.constant 0 : i32
    %c0_i32_1 = arith.constant 0 : i32
    return %arg0, %c0_i32, %c0_i32_0 : i32, i32, i32
  }
}

</mosaic_0001>

<llo_original>
// kernel: tpu_custom_call.1
$region0: #{tpu_custom_call.1}
  #allocation0 [shape = 'u32[]', space=smem, size = 0x4, offset = 0x4, fixed_abs, tag = 'smem constant byte address 0x4 - core index']
  #allocation1 [shape = 'u32[144,128]{1,0:T(1,128)}', space=vmem, size = 0x12000, scoped, tag = 'internal scratch']
  %s0 = inlined_call_operand.vmem [shape: bf16[2,128,32], index: 0, kind: input, shape index: {}]
  %s1 = inlined_call_operand.vmem [shape: bf16[2,32,256], index: 1, kind: input, shape index: {}]
  %s2 = inlined_call_operand.vmem [shape: f32[128,1], index: 2, kind: input, shape index: {}]
  %s3 = inlined_call_operand.vmem [shape: bf16[128,128], index: 3, kind: input, shape index: {}]
  %s4 = inlined_call_operand.vmem [shape: f32[128,1], index: 4, kind: input, shape index: {}]
  %s5 = inlined_call_operand.vmem [shape: bf16[49,128], index: 5, kind: input, shape index: {}]
  %s6 = inlined_call_operand.vmem [shape: f32[49,1], index: 6, kind: input, shape index: {}]
  %s7 = inlined_call_operand.vmem [shape: f32[49,12], index: 7, kind: input, shape index: {}]
  %s8 = inlined_call_operand.vmem [shape: f32[1,12], index: 8, kind: input, shape index: {}]
  %s9 = inlined_call_operand.vmem [shape: f32[49,12], index: 9, kind: input, shape index: {}]
  %s10 = inlined_call_operand.vmem [shape: f32[49,1], index: 10, kind: input, shape index: {}]
  %s11 = inlined_call_operand.vmem [shape: f32[2,49,256], index: 11, kind: output, shape index: {}]
  %s12 = sld [smem:[#allocation0]]
  $region77: #{tpu_custom_call.1} parent=0
    _
  %s14 = ssub.s32 1, %s12
  %s15 = scalar_select 0, %s14, %s12
  loop: start=0, step=1, limit=4
  $region2: #{tpu_custom_call.1} parent=0 // loop_pre_header
    _
  $region3: #{tpu_custom_call.1} parent=0 // loop_header
    %s17 = sphi 0, %s21
    %p18 = scmp.ge.s32.totalorder %s17, 4
    %s27 = sphi 0, %s29
    %s30 = sphi 0, %s27
    %s31 = sphi 0, %s30
    %s47 = sphi 0, %s31
    %s53 = sphi 0, %s55
    %s56 = sphi 0, %s53
    %s57 = sphi 0, %s56
    %s73 = sphi 0, %s57
    %s77 = sphi 0, %s77
    %s79 = sphi 0, %s77
    %s80 = sphi 0, %s79
    %s94 = sphi 0, %s80
    %s98 = sphi 0, %s98
    %s100 = sphi 0, %s98
    %s101 = sphi 0, %s100
    %s115 = sphi 0, %s101
    %s119 = sphi 0, %s119
    %s121 = sphi 0, %s119
    %s122 = sphi 0, %s121
    %s136 = sphi 0, %s122
    %s140 = sphi 0, %s140
    %s142 = sphi 0, %s140
    %s143 = sphi 0, %s142
    %s157 = sphi 0, %s143
    %s161 = sphi 0, %s161
    %s163 = sphi 0, %s161
    %s164 = sphi 0, %s163
    %s178 = sphi 0, %s164
    %s182 = sphi 0, %s182
    %s184 = sphi 0, %s182
    %s185 = sphi 0, %s184
    %s199 = sphi 0, %s185
    %s203 = sphi 0, %s203
    %s205 = sphi 0, %s203
    %s206 = sphi 0, %s205
    %s220 = sphi 0, %s206
    %s224 = sphi 0, %s224
    %s226 = sphi 0, %s224
    %s227 = sphi 0, %s226
    %s241 = sphi 0, %s227
    %s245 = sphi 0, %s245
    %s247 = sphi 0, %s245
    %s248 = sphi 0, %s247
    %s262 = sphi 0, %s248
    %s268 = sphi 0, %s270
    %s271 = sphi 0, %s268
    %s272 = sphi 0, %s271
    %s288 = sphi 0, %s272
  $region4: #{tpu_custom_call.1} parent=0 // loop_header_branch
    %20 = sbr.rel (%p18) target = $region8
  $region5: #{tpu_custom_call.1} parent=0 // loop_body
    %s22 = ssub.s32 %s17, 1
    %s23 = ssub.s32 %s17, 2
    %s24 = sadd.s32 %s17, 1
    %s25 = ssub.s32 %s17, %s24
    %p26 = scmp.eq.s32.totalorder %s25, 0
    %s28 = sadd.s32 %s27, 1
    %s29 = scalar_select %p26, %s27, %s28
    %p32 = pneg %p26
    %p33 = scmp.eq.s32.totalorder %s17, 1
    %p34 = por %p32, %p33
    %p35 = scmp.ne.s32.totalorder %s27, %s30
    %p36 = scmp.eq.s32.totalorder %s17, 0
    %p37 = por %p35, %p36
    %p38 = scmp.ne.s32.totalorder %s27, %s30
    %p39 = scmp.eq.s32.totalorder %s22, 1
    %p40 = por %p38, %p39
    %p41 = scmp.ne.s32.totalorder %s30, %s31
    %p42 = scmp.eq.s32.totalorder %s22, 0
    %p43 = por %p41, %p42
    %p44 = scmp.ne.s32.totalorder %s30, %s31
    %p45 = scmp.eq.s32.totalorder %s23, 1
    %p46 = por %p44, %p45
    %p48 = scmp.ne.s32.totalorder %s31, %s47
    %p49 = scmp.eq.s32.totalorder %s23, 0
    %p50 = por %p48, %p49
    %s51 = ssub.s32 %s17, %s24
    %p52 = scmp.eq.s32.totalorder %s51, 0
    %s54 = sadd.s32 %s53, 1
    %s55 = scalar_select %p52, %s53, %s54
    %p58 = pneg %p52
    %p59 = scmp.eq.s32.totalorder %s17, 1
    %p60 = por %p58, %p59
    %p61 = scmp.ne.s32.totalorder %s53, %s56
    %p62 = scmp.eq.s32.totalorder %s17, 0
    %p63 = por %p61, %p62
    %p64 = scmp.ne.s32.totalorder %s53, %s56
    %p65 = scmp.eq.s32.totalorder %s22, 1
    %p66 = por %p64, %p65
    %p67 = scmp.ne.s32.totalorder %s56, %s57
    %p68 = scmp.eq.s32.totalorder %s22, 0
    %p69 = por %p67, %p68
    %p70 = scmp.ne.s32.totalorder %s56, %s57
    %p71 = scmp.eq.s32.totalorder %s23, 1
    %p72 = por %p70, %p71
    %p74 = scmp.ne.s32.totalorder %s57, %s73
    %p75 = scmp.eq.s32.totalorder %s23, 0
    %p76 = por %p74, %p75
    %s78 = sadd.s32 %s77, 1
    %p81 = scmp.eq.s32.totalorder %s17, 1
    %p82 = scmp.ne.s32.totalorder %s77, %s79
    %p83 = scmp.eq.s32.totalorder %s17, 0
    %p84 = por %p82, %p83
    %p85 = scmp.ne.s32.totalorder %s77, %s79
    %p86 = scmp.eq.s32.totalorder %s22, 1
    %p87 = por %p85, %p86
    %p88 = scmp.ne.s32.totalorder %s79, %s80
    %p89 = scmp.eq.s32.totalorder %s22, 0
    %p90 = por %p88, %p89
    %p91 = scmp.ne.s32.totalorder %s79, %s80
    %p92 = scmp.eq.s32.totalorder %s23, 1
    %p93 = por %p91, %p92
    %p95 = scmp.ne.s32.totalorder %s80, %s94
    %p96 = scmp.eq.s32.totalorder %s23, 0
    %p97 = por %p95, %p96
    %s99 = sadd.s32 %s98, 1
    %p102 = scmp.eq.s32.totalorder %s17, 1
    %p103 = scmp.ne.s32.totalorder %s98, %s100
    %p104 = scmp.eq.s32.totalorder %s17, 0
    %p105 = por %p103, %p104
    %p106 = scmp.ne.s32.totalorder %s98, %s100
    %p107 = scmp.eq.s32.totalorder %s22, 1
    %p108 = por %p106, %p107
    %p109 = scmp.ne.s32.totalorder %s100, %s101
    %p110 = scmp.eq.s32.totalorder %s22, 0
    %p111 = por %p109, %p110
    %p112 = scmp.ne.s32.totalorder %s100, %s101
    %p113 = scmp.eq.s32.totalorder %s23, 1
    %p114 = por %p112, %p113
    %p116 = scmp.ne.s32.totalorder %s101, %s115
    %p117 = scmp.eq.s32.totalorder %s23, 0
    %p118 = por %p116, %p117
    %s120 = sadd.s32 %s119, 1
    %p123 = scmp.eq.s32.totalorder %s17, 1
    %p124 = scmp.ne.s32.totalorder %s119, %s121
    %p125 = scmp.eq.s32.totalorder %s17, 0
    %p126 = por %p124, %p125
    %p127 = scmp.ne.s32.totalorder %s119, %s121
    %p128 = scmp.eq.s32.totalorder %s22, 1
    %p129 = por %p127, %p128
    %p130 = scmp.ne.s32.totalorder %s121, %s122
    %p131 = scmp.eq.s32.totalorder %s22, 0
    %p132 = por %p130, %p131
    %p133 = scmp.ne.s32.totalorder %s121, %s122
    %p134 = scmp.eq.s32.totalorder %s23, 1
    %p135 = por %p133, %p134
    %p137 = scmp.ne.s32.totalorder %s122, %s136
    %p138 = scmp.eq.s32.totalorder %s23, 0
    %p139 = por %p137, %p138
    %s141 = sadd.s32 %s140, 1
    %p144 = scmp.eq.s32.totalorder %s17, 1
    %p145 = scmp.ne.s32.totalorder %s140, %s142
    %p146 = scmp.eq.s32.totalorder %s17, 0
    %p147 = por %p145, %p146
    %p148 = scmp.ne.s32.totalorder %s140, %s142
    %p149 = scmp.eq.s32.totalorder %s22, 1
    %p150 = por %p148, %p149
    %p151 = scmp.ne.s32.totalorder %s142, %s143
    %p152 = scmp.eq.s32.totalorder %s22, 0
    %p153 = por %p151, %p152
    %p154 = scmp.ne.s32.totalorder %s142, %s143
    %p155 = scmp.eq.s32.totalorder %s23, 1
    %p156 = por %p154, %p155
    %p158 = scmp.ne.s32.totalorder %s143, %s157
    %p159 = scmp.eq.s32.totalorder %s23, 0
    %p160 = por %p158, %p159
    %s162 = sadd.s32 %s161, 1
    %p165 = scmp.eq.s32.totalorder %s17, 1
    %p166 = scmp.ne.s32.totalorder %s161, %s163
    %p167 = scmp.eq.s32.totalorder %s17, 0
    %p168 = por %p166, %p167
    %p169 = scmp.ne.s32.totalorder %s161, %s163
    %p170 = scmp.eq.s32.totalorder %s22, 1
    %p171 = por %p169, %p170
    %p172 = scmp.ne.s32.totalorder %s163, %s164
    %p173 = scmp.eq.s32.totalorder %s22, 0
    %p174 = por %p172, %p173
    %p175 = scmp.ne.s32.totalorder %s163, %s164
    %p176 = scmp.eq.s32.totalorder %s23, 1
    %p177 = por %p175, %p176
    %p179 = scmp.ne.s32.totalorder %s164, %s178
    %p180 = scmp.eq.s32.totalorder %s23, 0
    %p181 = por %p179, %p180
    %s183 = sadd.s32 %s182, 1
    %p186 = scmp.eq.s32.totalorder %s17, 1
    %p187 = scmp.ne.s32.totalorder %s182, %s184
    %p188 = scmp.eq.s32.totalorder %s17, 0
    %p189 = por %p187, %p188
    %p190 = scmp.ne.s32.totalorder %s182, %s184
    %p191 = scmp.eq.s32.totalorder %s22, 1
    %p192 = por %p190, %p191
    %p193 = scmp.ne.s32.totalorder %s184, %s185
    %p194 = scmp.eq.s32.totalorder %s22, 0
    %p195 = por %p193, %p194
    %p196 = scmp.ne.s32.totalorder %s184, %s185
    %p197 = scmp.eq.s32.totalorder %s23, 1
    %p198 = por %p196, %p197
    %p200 = scmp.ne.s32.totalorder %s185, %s199
    %p201 = scmp.eq.s32.totalorder %s23, 0
    %p202 = por %p200, %p201
    %s204 = sadd.s32 %s203, 1
    %p207 = scmp.eq.s32.totalorder %s17, 1
    %p208 = scmp.ne.s32.totalorder %s203, %s205
    %p209 = scmp.eq.s32.totalorder %s17, 0
    %p210 = por %p208, %p209
    %p211 = scmp.ne.s32.totalorder %s203, %s205
    %p212 = scmp.eq.s32.totalorder %s22, 1
    %p213 = por %p211, %p212
    %p214 = scmp.ne.s32.totalorder %s205, %s206
    %p215 = scmp.eq.s32.totalorder %s22, 0
    %p216 = por %p214, %p215
    %p217 = scmp.ne.s32.totalorder %s205, %s206
    %p218 = scmp.eq.s32.totalorder %s23, 1
    %p219 = por %p217, %p218
    %p221 = scmp.ne.s32.totalorder %s206, %s220
    %p222 = scmp.eq.s32.totalorder %s23, 0
    %p223 = por %p221, %p222
    %s225 = sadd.s32 %s224, 1
    %p228 = scmp.eq.s32.totalorder %s17, 1
    %p229 = scmp.ne.s32.totalorder %s224, %s226
    %p230 = scmp.eq.s32.totalorder %s17, 0
    %p231 = por %p229, %p230
    %p232 = scmp.ne.s32.totalorder %s224, %s226
    %p233 = scmp.eq.s32.totalorder %s22, 1
    %p234 = por %p232, %p233
    %p235 = scmp.ne.s32.totalorder %s226, %s227
    %p236 = scmp.eq.s32.totalorder %s22, 0
    %p237 = por %p235, %p236
    %p238 = scmp.ne.s32.totalorder %s226, %s227
    %p239 = scmp.eq.s32.totalorder %s23, 1
    %p240 = por %p238, %p239
    %p242 = scmp.ne.s32.totalorder %s227, %s241
    %p243 = scmp.eq.s32.totalorder %s23, 0
    %p244 = por %p242, %p243
    %s246 = sadd.s32 %s245, 1
    %p249 = scmp.eq.s32.totalorder %s17, 1
    %p250 = scmp.ne.s32.totalorder %s245, %s247
    %p251 = scmp.eq.s32.totalorder %s17, 0
    %p252 = por %p250, %p251
    %p253 = scmp.ne.s32.totalorder %s245, %s247
    %p254 = scmp.eq.s32.totalorder %s22, 1
    %p255 = por %p253, %p254
    %p256 = scmp.ne.s32.totalorder %s247, %s248
    %p257 = scmp.eq.s32.totalorder %s22, 0
    %p258 = por %p256, %p257
    %p259 = scmp.ne.s32.totalorder %s247, %s248
    %p260 = scmp.eq.s32.totalorder %s23, 1
    %p261 = por %p259, %p260
    %p263 = scmp.ne.s32.totalorder %s248, %s262
    %p264 = scmp.eq.s32.totalorder %s23, 0
    %p265 = por %p263, %p264
    %s266 = ssub.s32 %s17, %s24
    %p267 = scmp.eq.s32.totalorder %s266, 0
    %s269 = sadd.s32 %s268, 1
    %s270 = scalar_select %p267, %s268, %s269
    %p273 = pneg %p267
    %p274 = scmp.eq.s32.totalorder %s17, 1
    %p275 = por %p273, %p274
    %p276 = scmp.ne.s32.totalorder %s268, %s271
    %p277 = scmp.eq.s32.totalorder %s17, 0
    %p278 = por %p276, %p277
    %p279 = scmp.ne.s32.totalorder %s268, %s271
    %p280 = scmp.eq.s32.totalorder %s22, 1
    %p281 = por %p279, %p280
    %p282 = scmp.ne.s32.totalorder %s271, %s272
    %p283 = scmp.eq.s32.totalorder %s22, 0
    %p284 = por %p282, %p283
    %p285 = scmp.ne.s32.totalorder %s271, %s272
    %p286 = scmp.eq.s32.totalorder %s23, 1
    %p287 = por %p285, %p286
    %p289 = scmp.ne.s32.totalorder %s272, %s288
    %p290 = scmp.eq.s32.totalorder %s23, 0
    %p291 = por %p289, %p290
    %p292 = scmp.le.s32.totalorder 1, %s17
    %p293 = scmp.lt.s32.totalorder %s17, 3
    %p294 = pnand %p292, %p293
    %p295 = pneg %p294
    // Predicated region
    $region9: #{tpu_custom_call.1} parent=5 // pred_check
      _
    $region10: #{tpu_custom_call.1} parent=5 // pred_check_branch
      %297 = sbr.rel (%p294) target = $region12
    $region11: #{tpu_custom_call.1} parent=5 // pred_region
      %s298 = ssub.s32 %s17, 1
      // Predicated region
      $region13: #{tpu_custom_call.1} parent=11 // pred_check
        %p299 = pneg %p90
      $region14: #{tpu_custom_call.1} parent=11 // pred_check_branch
        %301 = sbr.rel (%p299) target = $region16
      $region15: #{tpu_custom_call.1} parent=11 // pred_region
        _
      $region16: #{tpu_custom_call.1} parent=11 // pred_fallthru
        _
      // Predicated region
      $region17: #{tpu_custom_call.1} parent=11 // pred_check
        %p302 = pneg %p111
      $region18: #{tpu_custom_call.1} parent=11 // pred_check_branch
        %304 = sbr.rel (%p302) target = $region20
      $region19: #{tpu_custom_call.1} parent=11 // pred_region
        _
      $region20: #{tpu_custom_call.1} parent=11 // pred_fallthru
        _
      // Predicated region
      $region21: #{tpu_custom_call.1} parent=11 // pred_check
        %p305 = pneg %p132
      $region22: #{tpu_custom_call.1} parent=11 // pred_check_branch
        %307 = sbr.rel (%p305) target = $region24
      $region23: #{tpu_custom_call.1} parent=11 // pred_region
        _
      $region24: #{tpu_custom_call.1} parent=11 // pred_fallthru
        _
      // Predicated region
      $region25: #{tpu_custom_call.1} parent=11 // pred_check
        %p308 = pneg %p153
      $region26: #{tpu_custom_call.1} parent=11 // pred_check_branch
        %310 = sbr.rel (%p308) target = $region28
      $region27: #{tpu_custom_call.1} parent=11 // pred_region
        _
      $region28: #{tpu_custom_call.1} parent=11 // pred_fallthru
        _
      // Predicated region
      $region29: #{tpu_custom_call.1} parent=11 // pred_check
        %p311 = pneg %p174
      $region30: #{tpu_custom_call.1} parent=11 // pred_check_branch
        %313 = sbr.rel (%p311) target = $region32
      $region31: #{tpu_custom_call.1} parent=11 // pred_region
        _
      $region32: #{tpu_custom_call.1} parent=11 // pred_fallthru
        _
      // Predicated region
      $region33: #{tpu_custom_call.1} parent=11 // pred_check
        %p314 = pneg %p195
      $region34: #{tpu_custom_call.1} parent=11 // pred_check_branch
        %316 = sbr.rel (%p314) target = $region36
      $region35: #{tpu_custom_call.1} parent=11 // pred_region
        _
      $region36: #{tpu_custom_call.1} parent=11 // pred_fallthru
        _
      // Predicated region
      $region37: #{tpu_custom_call.1} parent=11 // pred_check
        %p317 = pneg %p216
      $region38: #{tpu_custom_call.1} parent=11 // pred_check_branch
        %319 = sbr.rel (%p317) target = $region40
      $region39: #{tpu_custom_call.1} parent=11 // pred_region
        _
      $region40: #{tpu_custom_call.1} parent=11 // pred_fallthru
        _
      // Predicated region
      $region41: #{tpu_custom_call.1} parent=11 // pred_check
        %p320 = pneg %p237
      $region42: #{tpu_custom_call.1} parent=11 // pred_check_branch
        %322 = sbr.rel (%p320) target = $region44
      $region43: #{tpu_custom_call.1} parent=11 // pred_region
        _
      $region44: #{tpu_custom_call.1} parent=11 // pred_fallthru
        _
      // Predicated region
      $region45: #{tpu_custom_call.1} parent=11 // pred_check
        %p323 = pneg %p258
      $region46: #{tpu_custom_call.1} parent=11 // pred_check_branch
        %325 = sbr.rel (%p323) target = $region48
      $region47: #{tpu_custom_call.1} parent=11 // pred_region
        _
      $region48: #{tpu_custom_call.1} parent=11 // pred_fallthru
        _
    $region12: #{tpu_custom_call.1} parent=5 // pred_fallthru
      _
    %p326 = scmp.lt.s32.totalorder %s17, 2
    // Predicated region
    $region49: #{tpu_custom_call.1} parent=5 // pred_check
      %p327 = pneg %p326
    $region50: #{tpu_custom_call.1} parent=5 // pred_check_branch
      %329 = sbr.rel (%p327) target = $region52
    $region51: #{tpu_custom_call.1} parent=5 // pred_region
      // Predicated region
      $region53: #{tpu_custom_call.1} parent=51 // pred_check
        %p330 = pneg %p37
      $region54: #{tpu_custom_call.1} parent=51 // pred_check_branch
        %332 = sbr.rel (%p330) target = $region56
      $region55: #{tpu_custom_call.1} parent=51 // pred_region
        %p333 = scmp.lt.s32.totalorder %s17, 1
        %s334 = scalar_select %p333, %s17, 1
        %s335 = smul.addr %s334, 16
        %s336 = smul.addr %s335, 4
        %s337 = scalar_lea.vmem %s0, %s336
      $region56: #{tpu_custom_call.1} parent=51 // pred_fallthru
        _
      // Predicated region
      $region57: #{tpu_custom_call.1} parent=51 // pred_check
        %p338 = pneg %p63
      $region58: #{tpu_custom_call.1} parent=51 // pred_check_branch
        %340 = sbr.rel (%p338) target = $region60
      $region59: #{tpu_custom_call.1} parent=51 // pred_region
        %p341 = scmp.lt.s32.totalorder %s17, 1
        %s342 = scalar_select %p341, %s17, 1
        %s343 = smul.addr %s342, 8
        %s344 = smul.addr %s343, 4
        %s345 = scalar_lea.vmem %s1, %s344
      $region60: #{tpu_custom_call.1} parent=51 // pred_fallthru
        _
    $region52: #{tpu_custom_call.1} parent=5 // pred_fallthru
      _
    %p346 = scmp.le.s32.totalorder 1, %s17
    %p347 = scmp.lt.s32.totalorder %s17, 3
    %p348 = pnand %p346, %p347
    %p349 = pneg %p348
    // Predicated region
    $region61: #{tpu_custom_call.1} parent=5 // pred_check
      _
    $region62: #{tpu_custom_call.1} parent=5 // pred_check_branch
      %351 = sbr.rel (%p348) target = $region64
    $region63: #{tpu_custom_call.1} parent=5 // pred_region
      %s352 = ssub.s32 %s17, 1
      %p353 = scmp.lt.s32.totalorder %s22, 1
      %s354 = scalar_select %p353, %s22, 1
      %s355 = smul.addr %s354, 16
      %s356 = smul.addr %s355, 4
      %s357 = scalar_lea.vmem %s0, %s356
      %p358 = pneg %p43
      %p359 = pneg %p40
      %p360 = scmp.lt.s32.totalorder %s22, 1
      %s361 = scalar_select %p360, %s22, 1
      %s362 = smul.addr %s361, 8
      %s363 = smul.addr %s362, 4
      %s364 = scalar_lea.vmem %s1, %s363
      %p365 = pneg %p69
      %p366 = pneg %p66
      %p367 = pneg %p90
      %p368 = pneg %p87
      %p369 = pneg %p111
      %p370 = pneg %p108
      %p371 = pneg %p132
      %p372 = pneg %p129
      %p373 = pneg %p153
      %p374 = pneg %p150
      %p375 = pneg %p174
      %p376 = pneg %p171
      %p377 = pneg %p195
      %p378 = pneg %p192
      %p379 = pneg %p216
      %p380 = pneg %p213
      %p381 = pneg %p237
      %p382 = pneg %p234
      %p383 = pneg %p258
      %p384 = pneg %p255
      %p385 = pneg %p284
      %p386 = pneg %p281
      %p387 = scmp.lt.s32.totalorder %s22, 1
      %s388 = scalar_select %p387, %s22, 1
      %s389 = smul.addr %s388, 14
      %s390 = smul.addr %s389, 8
      %s391 = scalar_lea.vmem %s11, %s390
      %p392 = scmp.lt.s32.totalorder %s22, 1
      %s393 = scalar_select %p392, %s22, 1
      %s394 = smul.addr %s393, 16
      %s395 = smul.addr %s394, 4
      %s396 = scalar_lea.vmem %s0, %s395
      %p397 = scmp.lt.s32.totalorder %s22, 1
      %s398 = scalar_select %p397, %s22, 1
      %s399 = smul.addr %s398, 8
      %s400 = smul.addr %s399, 4
      %s401 = scalar_lea.vmem %s1, %s400
      %p402 = scmp.lt.s32.totalorder %s22, 1
      %s403 = scalar_select %p402, %s22, 1
      %s404 = smul.addr %s403, 14
      %s405 = smul.addr %s404, 8
      %s406 = scalar_lea.vmem %s11, %s405
      %v408 = vld [vmem:[%s396] sm:$0xf]
      %v409 = vld [vmem:[%s396 + $0x4] sm:$0xf]
      %v410 = vld [vmem:[%s396 + $0x8] sm:$0xf]
      %v411 = vld [vmem:[%s396 + $0xc] sm:$0xf]
      %v412 = vld [vmem:[%s396 + $0x10] sm:$0xf]
      %v413 = vld [vmem:[%s396 + $0x14] sm:$0xf]
      %v414 = vld [vmem:[%s396 + $0x18] sm:$0xf]
      %v415 = vld [vmem:[%s396 + $0x1c] sm:$0xf]
      %v416 = vld [vmem:[%s396 + $0x20] sm:$0xf]
      %v417 = vld [vmem:[%s396 + $0x24] sm:$0xf]
      %v418 = vld [vmem:[%s396 + $0x28] sm:$0xf]
      %v419 = vld [vmem:[%s396 + $0x2c] sm:$0xf]
      %v420 = vld [vmem:[%s396 + $0x30] sm:$0xf]
      %v421 = vld [vmem:[%s396 + $0x34] sm:$0xf]
      %v422 = vld [vmem:[%s396 + $0x38] sm:$0xf]
      %v423 = vld [vmem:[%s396 + $0x3c] sm:$0xf]
      %v424 = vld [vmem:[%s401] sm:$0xff]
      %v425 = vld [vmem:[%s401 + $0x8] sm:$0xff]
      %v426 = vld [vmem:[%s401 + $0x10] sm:$0xff]
      %v427 = vld [vmem:[%s401 + $0x18] sm:$0xff]
      %v428 = vld [vmem:[%s2] sm:$0xff]
      %v429 = vld [vmem:[%s2 + $0x8] sm:$0xff]
      %v430 = vld [vmem:[%s2 + $0x10] sm:$0xff]
      %v431 = vld [vmem:[%s2 + $0x18] sm:$0xff]
      %v432 = vld [vmem:[%s2 + $0x20] sm:$0xff]
      %v433 = vld [vmem:[%s2 + $0x28] sm:$0xff]
      %v434 = vld [vmem:[%s2 + $0x30] sm:$0xff]
      %v435 = vld [vmem:[%s2 + $0x38] sm:$0xff]
      %v436 = vld [vmem:[%s2 + $0x40] sm:$0xff]
      %v437 = vld [vmem:[%s2 + $0x48] sm:$0xff]
      %v438 = vld [vmem:[%s2 + $0x50] sm:$0xff]
      %v439 = vld [vmem:[%s2 + $0x58] sm:$0xff]
      %v440 = vld [vmem:[%s2 + $0x60] sm:$0xff]
      %v441 = vld [vmem:[%s2 + $0x68] sm:$0xff]
      %v442 = vld [vmem:[%s2 + $0x70] sm:$0xff]
      %v443 = vld [vmem:[%s2 + $0x78] sm:$0xff]
      %445 = vset.pattern.permute.xlu0 0
      %446 = vperm.xlu0 %445, %v428
      %v447 = vpop.permute.xlu0 %446
      %450 = vset.pattern.permute.xlu0 0
      %451 = vperm.xlu0 %450, %v429
      %v452 = vpop.permute.xlu0 %451
      %455 = vset.pattern.permute.xlu0 0
      %456 = vperm.xlu0 %455, %v430
      %v457 = vpop.permute.xlu0 %456
      %460 = vset.pattern.permute.xlu0 0
      %461 = vperm.xlu0 %460, %v431
      %v462 = vpop.permute.xlu0 %461
      %465 = vset.pattern.permute.xlu0 0
      %466 = vperm.xlu0 %465, %v432
      %v467 = vpop.permute.xlu0 %466
      %470 = vset.pattern.permute.xlu0 0
      %471 = vperm.xlu0 %470, %v433
      %v472 = vpop.permute.xlu0 %471
      %475 = vset.pattern.permute.xlu0 0
      %476 = vperm.xlu0 %475, %v434
      %v477 = vpop.permute.xlu0 %476
      %480 = vset.pattern.permute.xlu0 0
      %481 = vperm.xlu0 %480, %v435
      %v482 = vpop.permute.xlu0 %481
      %485 = vset.pattern.permute.xlu0 0
      %486 = vperm.xlu0 %485, %v436
      %v487 = vpop.permute.xlu0 %486
      %490 = vset.pattern.permute.xlu0 0
      %491 = vperm.xlu0 %490, %v437
      %v492 = vpop.permute.xlu0 %491
      %495 = vset.pattern.permute.xlu0 0
      %496 = vperm.xlu0 %495, %v438
      %v497 = vpop.permute.xlu0 %496
      %500 = vset.pattern.permute.xlu0 0
      %501 = vperm.xlu0 %500, %v439
      %v502 = vpop.permute.xlu0 %501
      %505 = vset.pattern.permute.xlu0 0
      %506 = vperm.xlu0 %505, %v440
      %v507 = vpop.permute.xlu0 %506
      %510 = vset.pattern.permute.xlu0 0
      %511 = vperm.xlu0 %510, %v441
      %v512 = vpop.permute.xlu0 %511
      %515 = vset.pattern.permute.xlu0 0
      %516 = vperm.xlu0 %515, %v442
      %v517 = vpop.permute.xlu0 %516
      %520 = vset.pattern.permute.xlu0 0
      %521 = vperm.xlu0 %520, %v443
      %v522 = vpop.permute.xlu0 %521
      %v540 = vunpack.c.l.b16 %v408
      %v541 = vunpack.c.l.b16 %v409
      %v542 = vunpack.c.l.b16 %v410
      %v543 = vunpack.c.l.b16 %v411
      %v544 = vunpack.c.l.b16 %v412
      %v545 = vunpack.c.l.b16 %v413
      %v546 = vunpack.c.l.b16 %v414
      %v547 = vunpack.c.l.b16 %v415
      %v548 = vunpack.c.l.b16 %v416
      %v549 = vunpack.c.l.b16 %v417
      %v550 = vunpack.c.l.b16 %v418
      %v551 = vunpack.c.l.b16 %v419
      %v552 = vunpack.c.l.b16 %v420
      %v553 = vunpack.c.l.b16 %v421
      %v554 = vunpack.c.l.b16 %v422
      %v555 = vunpack.c.l.b16 %v423
      %v556 = vpack.c.b16 %v541, %v540
      %v557 = vpack.c.b16 %v543, %v542
      %v558 = vpack.c.b16 %v545, %v544
      %v559 = vpack.c.b16 %v547, %v546
      %v560 = vpack.c.b16 %v549, %v548
      %v561 = vpack.c.b16 %v551, %v550
      %v562 = vpack.c.b16 %v553, %v552
      %v563 = vpack.c.b16 %v555, %v554
      %v568 = vunpack.c.l.b16 %v424
      %v569 = vunpack.c.h.b16 %v424
      %v570 = vunpack.c.l.b16 %v425
      %v571 = vunpack.c.h.b16 %v425
      %v572 = vunpack.c.l.b16 %v426
      %v573 = vunpack.c.h.b16 %v426
      %v574 = vunpack.c.l.b16 %v427
      %v575 = vunpack.c.h.b16 %v427
      %v576 = vpack.c.b16 %v570, %v568
      %v577 = vpack.c.b16 %v571, %v569
      %v578 = vpack.c.b16 %v574, %v572
      %v579 = vpack.c.b16 %v575, %v573
      %vm584 = vcmask 261120
      %v586 = vsel %vm584, %v556, 0
      %v589 = vsel %vm584, %v557, 0
      %v592 = vsel %vm584, %v558, 0
      %v595 = vsel %vm584, %v559, 0
      %v598 = vsel %vm584, %v560, 0
      %v601 = vsel %vm584, %v561, 0
      %v604 = vsel %vm584, %v562, 0
      %v607 = vsel %vm584, %v563, 0
      %609 = vmatprep.subr.bf16.mxu0 0
      %610 = vmatpush1.bf16.msra.mxu0 0
      %611 = vmatprep.subr.bf16.mxu0 0
      %612 = vmatpush1.bf16.msra.mxu0 0
      %613 = vmatprep.subr.bf16.mxu0 0
      %614 = vmatpush1.bf16.msra.mxu0 0
      %615 = vmatprep.subr.bf16.mxu0 0
      %616 = vmatpush1.bf16.msra.mxu0 0
      %617 = vmatprep.subr.bf16.mxu0 0
      %618 = vmatpush1.bf16.msra.mxu0 0
      %619 = vmatprep.subr.bf16.mxu0 0
      %620 = vmatpush1.bf16.msra.mxu0 0
      %621 = vmatprep.subr.bf16.mxu0 %v579
      %622 = vmatpush1.bf16.msra.mxu0 %v578
      %623 = vmatprep.subr.bf16.mxu0 %v577
      %624 = vmatpush1.bf16.msra.mxu0 %v576
      %625 = vmatprep.subr.bf16.mxu0 0
      %626 = vmatpush2.bf16.msra.mxu0 0
      %627 = vmatprep.subr.bf16.mxu0 0
      %628 = vmatpush2.bf16.msra.mxu0 0
      %629 = vmatprep.subr.bf16.mxu0 0
      %630 = vmatpush2.bf16.msra.mxu0 0
      %631 = vmatprep.subr.bf16.mxu0 0
      %632 = vmatpush2.bf16.msra.mxu0 0
      %633 = vmatprep.subr.bf16.mxu0 0
      %634 = vmatpush2.bf16.msra.mxu0 0
      %635 = vmatprep.subr.bf16.mxu0 0
      %636 = vmatpush2.bf16.msra.mxu0 0
      %637 = vmatprep.subr.bf16.mxu0 0
      %638 = vmatpush2.bf16.msra.mxu0 0
      %639 = vmatprep.subr.bf16.mxu0 0
      %640 = vmatpush2.bf16.msra.mxu0 0
      %641 = vmatprep.mubr.bf16.mxu0 0
      %642 = vmatmul.mubr.bf16.gmra.mxu0 %v586
      %v643 = vpop.f32.mrf.mxu0
      %v644 = vadd.f32 %v447, %v643
      %v645 = vpop.f32.mrf.mxu0
      %v646 = vadd.f32 %v447, %v645
      %v647 = vpop.f32.mrf.mxu0
      %v648 = vadd.f32 %v452, %v647
      %v649 = vpop.f32.mrf.mxu0
      %v650 = vadd.f32 %v452, %v649
      %651 = vmatprep.mubr.bf16.mxu0 0
      %652 = vmatmul.mubr.bf16.gmra.mxu0 %v589
      %v653 = vpop.f32.mrf.mxu0
      %v654 = vadd.f32 %v457, %v653
      %v655 = vpop.f32.mrf.mxu0
      %v656 = vadd.f32 %v457, %v655
      %v657 = vpop.f32.mrf.mxu0
      %v658 = vadd.f32 %v462, %v657
      %v659 = vpop.f32.mrf.mxu0
      %v660 = vadd.f32 %v462, %v659
      %661 = vmatprep.mubr.bf16.mxu0 0
      %662 = vmatmul.mubr.bf16.gmra.mxu0 %v592
      %v663 = vpop.f32.mrf.mxu0
      %v664 = vadd.f32 %v467, %v663
      %v665 = vpop.f32.mrf.mxu0
      %v666 = vadd.f32 %v467, %v665
      %v667 = vpop.f32.mrf.mxu0
      %v668 = vadd.f32 %v472, %v667
      %v669 = vpop.f32.mrf.mxu0
      %v670 = vadd.f32 %v472, %v669
      %671 = vmatprep.mubr.bf16.mxu0 0
      %672 = vmatmul.mubr.bf16.gmra.mxu0 %v595
      %v673 = vpop.f32.mrf.mxu0
      %v674 = vadd.f32 %v477, %v673
      %v675 = vpop.f32.mrf.mxu0
      %v676 = vadd.f32 %v477, %v675
      %v677 = vpop.f32.mrf.mxu0
      %v678 = vadd.f32 %v482, %v677
      %v679 = vpop.f32.mrf.mxu0
      %v680 = vadd.f32 %v482, %v679
      %681 = vmatprep.mubr.bf16.mxu0 0
      %682 = vmatmul.mubr.bf16.gmra.mxu0 %v598
      %v683 = vpop.f32.mrf.mxu0
      %v684 = vadd.f32 %v487, %v683
      %v685 = vpop.f32.mrf.mxu0
      %v686 = vadd.f32 %v487, %v685
      %v687 = vpop.f32.mrf.mxu0
      %v688 = vadd.f32 %v492, %v687
      %v689 = vpop.f32.mrf.mxu0
      %v690 = vadd.f32 %v492, %v689
      %691 = vmatprep.mubr.bf16.mxu0 0
      %692 = vmatmul.mubr.bf16.gmra.mxu0 %v601
      %v693 = vpop.f32.mrf.mxu0
      %v694 = vadd.f32 %v497, %v693
      %v695 = vpop.f32.mrf.mxu0
      %v696 = vadd.f32 %v497, %v695
      %v697 = vpop.f32.mrf.mxu0
      %v698 = vadd.f32 %v502, %v697
      %v699 = vpop.f32.mrf.mxu0
      %v700 = vadd.f32 %v502, %v699
      %701 = vmatprep.mubr.bf16.mxu0 0
      %702 = vmatmul.mubr.bf16.gmra.mxu0 %v604
      %v703 = vpop.f32.mrf.mxu0
      %v704 = vadd.f32 %v507, %v703
      %v705 = vpop.f32.mrf.mxu0
      %v706 = vadd.f32 %v507, %v705
      %v707 = vpop.f32.mrf.mxu0
      %v708 = vadd.f32 %v512, %v707
      %v709 = vpop.f32.mrf.mxu0
      %v710 = vadd.f32 %v512, %v709
      %711 = vmatprep.mubr.bf16.mxu0 0
      %712 = vmatmul.mubr.bf16.gmra.mxu0 %v607
      %v713 = vpop.f32.mrf.mxu0
      %v714 = vadd.f32 %v517, %v713
      %v715 = vpop.f32.mrf.mxu0
      %v716 = vadd.f32 %v517, %v715
      %v717 = vpop.f32.mrf.mxu0
      %v718 = vadd.f32 %v522, %v717
      %v719 = vpop.f32.mrf.mxu0
      %v720 = vadd.f32 %v522, %v719
      %721 = vdwg.mxu0
      %v722 = vmax.f32 %v644, 0.0
      %v723 = vmax.f32 %v646, 0.0
      %v724 = vmax.f32 %v648, 0.0
      %v725 = vmax.f32 %v650, 0.0
      %v726 = vmax.f32 %v654, 0.0
      %v727 = vmax.f32 %v656, 0.0
      %v728 = vmax.f32 %v658, 0.0
      %v729 = vmax.f32 %v660, 0.0
      %v730 = vmax.f32 %v664, 0.0
      %v731 = vmax.f32 %v666, 0.0
      %v732 = vmax.f32 %v668, 0.0
      %v733 = vmax.f32 %v670, 0.0
      %v734 = vmax.f32 %v674, 0.0
      %v735 = vmax.f32 %v676, 0.0
      %v736 = vmax.f32 %v678, 0.0
      %v737 = vmax.f32 %v680, 0.0
      %v738 = vmax.f32 %v684, 0.0
      %v739 = vmax.f32 %v686, 0.0
      %v740 = vmax.f32 %v688, 0.0
      %v741 = vmax.f32 %v690, 0.0
      %v742 = vmax.f32 %v694, 0.0
      %v743 = vmax.f32 %v696, 0.0
      %v744 = vmax.f32 %v698, 0.0
      %v745 = vmax.f32 %v700, 0.0
      %v746 = vmax.f32 %v704, 0.0
      %v747 = vmax.f32 %v706, 0.0
      %v748 = vmax.f32 %v708, 0.0
      %v749 = vmax.f32 %v710, 0.0
      %v750 = vmax.f32 %v714, 0.0
      %v751 = vmax.f32 %v716, 0.0
      %v752 = vmax.f32 %v718, 0.0
      %v753 = vmax.f32 %v720, 0.0
      %v754 = vld [vmem:[%s3] sm:$0xf]
      %v755 = vld [vmem:[%s3 + $0x4] sm:$0xf]
      %v756 = vld [vmem:[%s3 + $0x8] sm:$0xf]
      %v757 = vld [vmem:[%s3 + $0xc] sm:$0xf]
      %v758 = vld [vmem:[%s3 + $0x10] sm:$0xf]
      %v759 = vld [vmem:[%s3 + $0x14] sm:$0xf]
      %v760 = vld [vmem:[%s3 + $0x18] sm:$0xf]
      %v761 = vld [vmem:[%s3 + $0x1c] sm:$0xf]
      %v762 = vld [vmem:[%s3 + $0x20] sm:$0xf]
      %v763 = vld [vmem:[%s3 + $0x24] sm:$0xf]
      %v764 = vld [vmem:[%s3 + $0x28] sm:$0xf]
      %v765 = vld [vmem:[%s3 + $0x2c] sm:$0xf]
      %v766 = vld [vmem:[%s3 + $0x30] sm:$0xf]
      %v767 = vld [vmem:[%s3 + $0x34] sm:$0xf]
      %v768 = vld [vmem:[%s3 + $0x38] sm:$0xf]
      %v769 = vld [vmem:[%s3 + $0x3c] sm:$0xf]
      %v770 = vpack.c.bf16 %v724, %v722
      %v771 = vpack.c.bf16 %v725, %v723
      %v772 = vpack.c.bf16 %v728, %v726
      %v773 = vpack.c.bf16 %v729, %v727
      %v774 = vpack.c.bf16 %v732, %v730
      %v775 = vpack.c.bf16 %v733, %v731
      %v776 = vpack.c.bf16 %v736, %v734
      %v777 = vpack.c.bf16 %v737, %v735
      %v778 = vpack.c.bf16 %v740, %v738
      %v779 = vpack.c.bf16 %v741, %v739
      %v780 = vpack.c.bf16 %v744, %v742
      %v781 = vpack.c.bf16 %v745, %v743
      %v782 = vpack.c.bf16 %v748, %v746
      %v783 = vpack.c.bf16 %v749, %v747
      %v784 = vpack.c.bf16 %v752, %v750
      %v785 = vpack.c.bf16 %v753, %v751
      %v786 = vld [vmem:[%s4] sm:$0xff]
      %v787 = vld [vmem:[%s4 + $0x8] sm:$0xff]
      %v788 = vld [vmem:[%s4 + $0x10] sm:$0xff]
      %v789 = vld [vmem:[%s4 + $0x18] sm:$0xff]
      %v790 = vld [vmem:[%s4 + $0x20] sm:$0xff]
      %v791 = vld [vmem:[%s4 + $0x28] sm:$0xff]
      %v792 = vld [vmem:[%s4 + $0x30] sm:$0xff]
      %v793 = vld [vmem:[%s4 + $0x38] sm:$0xff]
      %v794 = vld [vmem:[%s4 + $0x40] sm:$0xff]
      %v795 = vld [vmem:[%s4 + $0x48] sm:$0xff]
      %v796 = vld [vmem:[%s4 + $0x50] sm:$0xff]
      %v797 = vld [vmem:[%s4 + $0x58] sm:$0xff]
      %v798 = vld [vmem:[%s4 + $0x60] sm:$0xff]
      %v799 = vld [vmem:[%s4 + $0x68] sm:$0xff]
      %v800 = vld [vmem:[%s4 + $0x70] sm:$0xff]
      %v801 = vld [vmem:[%s4 + $0x78] sm:$0xff]
      %803 = vset.pattern.permute.xlu0 0
      %804 = vperm.xlu0 %803, %v786
      %v805 = vpop.permute.xlu0 %804
      %808 = vset.pattern.permute.xlu0 0
      %809 = vperm.xlu0 %808, %v787
      %v810 = vpop.permute.xlu0 %809
      %813 = vset.pattern.permute.xlu0 0
      %814 = vperm.xlu0 %813, %v788
      %v815 = vpop.permute.xlu0 %814
      %818 = vset.pattern.permute.xlu0 0
      %819 = vperm.xlu0 %818, %v789
      %v820 = vpop.permute.xlu0 %819
      %823 = vset.pattern.permute.xlu0 0
      %824 = vperm.xlu0 %823, %v790
      %v825 = vpop.permute.xlu0 %824
      %828 = vset.pattern.permute.xlu0 0
      %829 = vperm.xlu0 %828, %v791
      %v830 = vpop.permute.xlu0 %829
      %833 = vset.pattern.permute.xlu0 0
      %834 = vperm.xlu0 %833, %v792
      %v835 = vpop.permute.xlu0 %834
      %838 = vset.pattern.permute.xlu0 0
      %839 = vperm.xlu0 %838, %v793
      %v840 = vpop.permute.xlu0 %839
      %843 = vset.pattern.permute.xlu0 0
      %844 = vperm.xlu0 %843, %v794
      %v845 = vpop.permute.xlu0 %844
      %848 = vset.pattern.permute.xlu0 0
      %849 = vperm.xlu0 %848, %v795
      %v850 = vpop.permute.xlu0 %849
      %853 = vset.pattern.permute.xlu0 0
      %854 = vperm.xlu0 %853, %v796
      %v855 = vpop.permute.xlu0 %854
      %858 = vset.pattern.permute.xlu0 0
      %859 = vperm.xlu0 %858, %v797
      %v860 = vpop.permute.xlu0 %859
      %863 = vset.pattern.permute.xlu0 0
      %864 = vperm.xlu0 %863, %v798
      %v865 = vpop.permute.xlu0 %864
      %868 = vset.pattern.permute.xlu0 0
      %869 = vperm.xlu0 %868, %v799
      %v870 = vpop.permute.xlu0 %869
      %873 = vset.pattern.permute.xlu0 0
      %874 = vperm.xlu0 %873, %v800
      %v875 = vpop.permute.xlu0 %874
      %878 = vset.pattern.permute.xlu0 0
      %879 = vperm.xlu0 %878, %v801
      %v880 = vpop.permute.xlu0 %879
      %v898 = vunpack.c.l.b16 %v754
      %v899 = vunpack.c.l.b16 %v755
      %v900 = vunpack.c.l.b16 %v756
      %v901 = vunpack.c.l.b16 %v757
      %v902 = vunpack.c.l.b16 %v758
      %v903 = vunpack.c.l.b16 %v759
      %v904 = vunpack.c.l.b16 %v760
      %v905 = vunpack.c.l.b16 %v761
      %v906 = vunpack.c.l.b16 %v762
      %v907 = vunpack.c.l.b16 %v763
      %v908 = vunpack.c.l.b16 %v764
      %v909 = vunpack.c.l.b16 %v765
      %v910 = vunpack.c.l.b16 %v766
      %v911 = vunpack.c.l.b16 %v767
      %v912 = vunpack.c.l.b16 %v768
      %v913 = vunpack.c.l.b16 %v769
      %v914 = vpack.c.b16 %v899, %v898
      %v915 = vpack.c.b16 %v901, %v900
      %v916 = vpack.c.b16 %v903, %v902
      %v917 = vpack.c.b16 %v905, %v904
      %v918 = vpack.c.b16 %v907, %v906
      %v919 = vpack.c.b16 %v909, %v908
      %v920 = vpack.c.b16 %v911, %v910
      %v921 = vpack.c.b16 %v913, %v912
      %930 = vmatprep.subr.bf16.mxu0 %v785
      %931 = vmatpush1.bf16.msra.mxu0 %v784
      %932 = vmatprep.subr.bf16.mxu0 %v783
      %933 = vmatpush1.bf16.msra.mxu0 %v782
      %934 = vmatprep.subr.bf16.mxu0 %v781
      %935 = vmatpush1.bf16.msra.mxu0 %v780
      %936 = vmatprep.subr.bf16.mxu0 %v779
      %937 = vmatpush1.bf16.msra.mxu0 %v778
      %938 = vmatprep.subr.bf16.mxu0 %v777
      %939 = vmatpush1.bf16.msra.mxu0 %v776
      %940 = vmatprep.subr.bf16.mxu0 %v775
      %941 = vmatpush1.bf16.msra.mxu0 %v774
      %942 = vmatprep.subr.bf16.mxu0 %v773
      %943 = vmatpush1.bf16.msra.mxu0 %v772
      %944 = vmatprep.subr.bf16.mxu0 %v771
      %945 = vmatpush1.bf16.msra.mxu0 %v770
      %946 = vmatprep.subr.bf16.mxu0 0
      %947 = vmatpush2.bf16.msra.mxu0 0
      %948 = vmatprep.subr.bf16.mxu0 0
      %949 = vmatpush2.bf16.msra.mxu0 0
      %950 = vmatprep.subr.bf16.mxu0 0
      %951 = vmatpush2.bf16.msra.mxu0 0
      %952 = vmatprep.subr.bf16.mxu0 0
      %953 = vmatpush2.bf16.msra.mxu0 0
      %954 = vmatprep.subr.bf16.mxu0 0
      %955 = vmatpush2.bf16.msra.mxu0 0
      %956 = vmatprep.subr.bf16.mxu0 0
      %957 = vmatpush2.bf16.msra.mxu0 0
      %958 = vmatprep.subr.bf16.mxu0 0
      %959 = vmatpush2.bf16.msra.mxu0 0
      %960 = vmatprep.subr.bf16.mxu0 0
      %961 = vmatpush2.bf16.msra.mxu0 0
      %962 = vmatprep.mubr.bf16.mxu0 0
      %963 = vmatmul.mubr.bf16.gmra.mxu0 %v914
      %v964 = vpop.f32.mrf.mxu0
      %v965 = vadd.f32 %v805, %v964
      %v966 = vpop.f32.mrf.mxu0
      %v967 = vadd.f32 %v805, %v966
      %v968 = vpop.f32.mrf.mxu0
      %v969 = vadd.f32 %v810, %v968
      %v970 = vpop.f32.mrf.mxu0
      %v971 = vadd.f32 %v810, %v970
      %972 = vmatprep.mubr.bf16.mxu0 0
      %973 = vmatmul.mubr.bf16.gmra.mxu0 %v915
      %v974 = vpop.f32.mrf.mxu0
      %v975 = vadd.f32 %v815, %v974
      %v976 = vpop.f32.mrf.mxu0
      %v977 = vadd.f32 %v815, %v976
      %v978 = vpop.f32.mrf.mxu0
      %v979 = vadd.f32 %v820, %v978
      %v980 = vpop.f32.mrf.mxu0
      %v981 = vadd.f32 %v820, %v980
      %982 = vmatprep.mubr.bf16.mxu0 0
      %983 = vmatmul.mubr.bf16.gmra.mxu0 %v916
      %v984 = vpop.f32.mrf.mxu0
      %v985 = vadd.f32 %v825, %v984
      %v986 = vpop.f32.mrf.mxu0
      %v987 = vadd.f32 %v825, %v986
      %v988 = vpop.f32.mrf.mxu0
      %v989 = vadd.f32 %v830, %v988
      %v990 = vpop.f32.mrf.mxu0
      %v991 = vadd.f32 %v830, %v990
      %992 = vmatprep.mubr.bf16.mxu0 0
      %993 = vmatmul.mubr.bf16.gmra.mxu0 %v917
      %v994 = vpop.f32.mrf.mxu0
      %v995 = vadd.f32 %v835, %v994
      %v996 = vpop.f32.mrf.mxu0
      %v997 = vadd.f32 %v835, %v996
      %v998 = vpop.f32.mrf.mxu0
      %v999 = vadd.f32 %v840, %v998
      %v1000 = vpop.f32.mrf.mxu0
      %v1001 = vadd.f32 %v840, %v1000
      %1002 = vmatprep.mubr.bf16.mxu0 0
      %1003 = vmatmul.mubr.bf16.gmra.mxu0 %v918
      %v1004 = vpop.f32.mrf.mxu0
      %v1005 = vadd.f32 %v845, %v1004
      %v1006 = vpop.f32.mrf.mxu0
      %v1007 = vadd.f32 %v845, %v1006
      %v1008 = vpop.f32.mrf.mxu0
      %v1009 = vadd.f32 %v850, %v1008
      %v1010 = vpop.f32.mrf.mxu0
      %v1011 = vadd.f32 %v850, %v1010
      %1012 = vmatprep.mubr.bf16.mxu0 0
      %1013 = vmatmul.mubr.bf16.gmra.mxu0 %v919
      %v1014 = vpop.f32.mrf.mxu0
      %v1015 = vadd.f32 %v855, %v1014
      %v1016 = vpop.f32.mrf.mxu0
      %v1017 = vadd.f32 %v855, %v1016
      %v1018 = vpop.f32.mrf.mxu0
      %v1019 = vadd.f32 %v860, %v1018
      %v1020 = vpop.f32.mrf.mxu0
      %v1021 = vadd.f32 %v860, %v1020
      %1022 = vmatprep.mubr.bf16.mxu0 0
      %1023 = vmatmul.mubr.bf16.gmra.mxu0 %v920
      %v1024 = vpop.f32.mrf.mxu0
      %v1025 = vadd.f32 %v865, %v1024
      %v1026 = vpop.f32.mrf.mxu0
      %v1027 = vadd.f32 %v865, %v1026
      %v1028 = vpop.f32.mrf.mxu0
      %v1029 = vadd.f32 %v870, %v1028
      %v1030 = vpop.f32.mrf.mxu0
      %v1031 = vadd.f32 %v870, %v1030
      %1032 = vmatprep.mubr.bf16.mxu0 0
      %1033 = vmatmul.mubr.bf16.gmra.mxu0 %v921
      %v1034 = vpop.f32.mrf.mxu0
      %v1035 = vadd.f32 %v875, %v1034
      %v1036 = vpop.f32.mrf.mxu0
      %v1037 = vadd.f32 %v875, %v1036
      %v1038 = vpop.f32.mrf.mxu0
      %v1039 = vadd.f32 %v880, %v1038
      %v1040 = vpop.f32.mrf.mxu0
      %v1041 = vadd.f32 %v880, %v1040
      %1042 = vdwg.mxu0
      %v1043 = vmax.f32 %v965, 0.0
      %v1044 = vmax.f32 %v967, 0.0
      %v1045 = vmax.f32 %v969, 0.0
      %v1046 = vmax.f32 %v971, 0.0
      %v1047 = vmax.f32 %v975, 0.0
      %v1048 = vmax.f32 %v977, 0.0
      %v1049 = vmax.f32 %v979, 0.0
      %v1050 = vmax.f32 %v981, 0.0
      %v1051 = vmax.f32 %v985, 0.0
      %v1052 = vmax.f32 %v987, 0.0
      %v1053 = vmax.f32 %v989, 0.0
      %v1054 = vmax.f32 %v991, 0.0
      %v1055 = vmax.f32 %v995, 0.0
      %v1056 = vmax.f32 %v997, 0.0
      %v1057 = vmax.f32 %v999, 0.0
      %v1058 = vmax.f32 %v1001, 0.0
      %v1059 = vmax.f32 %v1005, 0.0
      %v1060 = vmax.f32 %v1007, 0.0
      %v1061 = vmax.f32 %v1009, 0.0
      %v1062 = vmax.f32 %v1011, 0.0
      %v1063 = vmax.f32 %v1015, 0.0
      %v1064 = vmax.f32 %v1017, 0.0
      %v1065 = vmax.f32 %v1019, 0.0
      %v1066 = vmax.f32 %v1021, 0.0
      %v1067 = vmax.f32 %v1025, 0.0
      %v1068 = vmax.f32 %v1027, 0.0
      %v1069 = vmax.f32 %v1029, 0.0
      %v1070 = vmax.f32 %v1031, 0.0
      %v1071 = vmax.f32 %v1035, 0.0
      %v1072 = vmax.f32 %v1037, 0.0
      %v1073 = vmax.f32 %v1039, 0.0
      %v1074 = vmax.f32 %v1041, 0.0
      %v1075 = vld [vmem:[%s5] sm:$0xf]
      %v1076 = vld [vmem:[%s5 + $0x4] sm:$0xf]
      %v1077 = vld [vmem:[%s5 + $0x8] sm:$0xf]
      %v1078 = vld [vmem:[%s5 + $0xc] sm:$0xf]
      %v1079 = vld [vmem:[%s5 + $0x10] sm:$0xf]
      %v1080 = vld [vmem:[%s5 + $0x14] sm:$0xf]
      %v1081 = vld [vmem:[%s5 + $0x18] sm:$0x1]
      %v1082 = vpack.c.bf16 %v1045, %v1043
      %v1083 = vpack.c.bf16 %v1046, %v1044
      %v1084 = vpack.c.bf16 %v1049, %v1047
      %v1085 = vpack.c.bf16 %v1050, %v1048
      %v1086 = vpack.c.bf16 %v1053, %v1051
      %v1087 = vpack.c.bf16 %v1054, %v1052
      %v1088 = vpack.c.bf16 %v1057, %v1055
      %v1089 = vpack.c.bf16 %v1058, %v1056
      %v1090 = vpack.c.bf16 %v1061, %v1059
      %v1091 = vpack.c.bf16 %v1062, %v1060
      %v1092 = vpack.c.bf16 %v1065, %v1063
      %v1093 = vpack.c.bf16 %v1066, %v1064
      %v1094 = vpack.c.bf16 %v1069, %v1067
      %v1095 = vpack.c.bf16 %v1070, %v1068
      %v1096 = vpack.c.bf16 %v1073, %v1071
      %v1097 = vpack.c.bf16 %v1074, %v1072
      %v1098 = vld [vmem:[%s6] sm:$0xff]
      %v1099 = vld [vmem:[%s6 + $0x8] sm:$0xff]
      %v1100 = vld [vmem:[%s6 + $0x10] sm:$0xff]
      %v1101 = vld [vmem:[%s6 + $0x18] sm:$0xff]
      %v1102 = vld [vmem:[%s6 + $0x20] sm:$0xff]
      %v1103 = vld [vmem:[%s6 + $0x28] sm:$0xff]
      %v1104 = vld [vmem:[%s6 + $0x30] sm:$0x1]
      %1106 = vset.pattern.permute.xlu0 0
      %1107 = vperm.xlu0 %1106, %v1098
      %v1108 = vpop.permute.xlu0 %1107
      %1111 = vset.pattern.permute.xlu0 0
      %1112 = vperm.xlu0 %1111, %v1099
      %v1113 = vpop.permute.xlu0 %1112
      %1116 = vset.pattern.permute.xlu0 0
      %1117 = vperm.xlu0 %1116, %v1100
      %v1118 = vpop.permute.xlu0 %1117
      %1121 = vset.pattern.permute.xlu0 0
      %1122 = vperm.xlu0 %1121, %v1101
      %v1123 = vpop.permute.xlu0 %1122
      %1126 = vset.pattern.permute.xlu0 0
      %1127 = vperm.xlu0 %1126, %v1102
      %v1128 = vpop.permute.xlu0 %1127
      %1131 = vset.pattern.permute.xlu0 0
      %1132 = vperm.xlu0 %1131, %v1103
      %v1133 = vpop.permute.xlu0 %1132
      %1136 = vset.pattern.permute.xlu0 0
      %1137 = vperm.xlu0 %1136, %v1104
      %v1138 = vpop.permute.xlu0 %1137
      %v1147 = vunpack.c.l.b16 %v1075
      %v1148 = vunpack.c.l.b16 %v1076
      %v1149 = vunpack.c.l.b16 %v1077
      %v1150 = vunpack.c.l.b16 %v1078
      %v1151 = vunpack.c.l.b16 %v1079
      %v1152 = vunpack.c.l.b16 %v1080
      %v1153 = vunpack.c.l.b16 %v1081
      %v1154 = vpack.c.b16 %v1148, %v1147
      %v1155 = vpack.c.b16 %v1150, %v1149
      %v1156 = vpack.c.b16 %v1152, %v1151
      %v1157 = vpack.c.b16 %v1153, %v1153
      %1162 = vmatprep.subr.bf16.mxu0 %v1097
      %1163 = vmatpush1.bf16.msra.mxu0 %v1096
      %1164 = vmatprep.subr.bf16.mxu0 %v1095
      %1165 = vmatpush1.bf16.msra.mxu0 %v1094
      %1166 = vmatprep.subr.bf16.mxu0 %v1093
      %1167 = vmatpush1.bf16.msra.mxu0 %v1092
      %1168 = vmatprep.subr.bf16.mxu0 %v1091
      %1169 = vmatpush1.bf16.msra.mxu0 %v1090
      %1170 = vmatprep.subr.bf16.mxu0 %v1089
      %1171 = vmatpush1.bf16.msra.mxu0 %v1088
      %1172 = vmatprep.subr.bf16.mxu0 %v1087
      %1173 = vmatpush1.bf16.msra.mxu0 %v1086
      %1174 = vmatprep.subr.bf16.mxu0 %v1085
      %1175 = vmatpush1.bf16.msra.mxu0 %v1084
      %1176 = vmatprep.subr.bf16.mxu0 %v1083
      %1177 = vmatpush1.bf16.msra.mxu0 %v1082
      %1178 = vmatprep.subr.bf16.mxu0 0
      %1179 = vmatpush2.bf16.msra.mxu0 0
      %1180 = vmatprep.subr.bf16.mxu0 0
      %1181 = vmatpush2.bf16.msra.mxu0 0
      %1182 = vmatprep.subr.bf16.mxu0 0
      %1183 = vmatpush2.bf16.msra.mxu0 0
      %1184 = vmatprep.subr.bf16.mxu0 0
      %1185 = vmatpush2.bf16.msra.mxu0 0
      %1186 = vmatprep.subr.bf16.mxu0 0
      %1187 = vmatpush2.bf16.msra.mxu0 0
      %1188 = vmatprep.subr.bf16.mxu0 0
      %1189 = vmatpush2.bf16.msra.mxu0 0
      %1190 = vmatprep.subr.bf16.mxu0 0
      %1191 = vmatpush2.bf16.msra.mxu0 0
      %1192 = vmatprep.subr.bf16.mxu0 0
      %1193 = vmatpush2.bf16.msra.mxu0 0
      %1194 = vmatprep.mubr.bf16.mxu0 0
      %1195 = vmatmul.mubr.bf16.gmra.mxu0 %v1154
      %v1196 = vpop.f32.mrf.mxu0
      %v1197 = vadd.f32 %v1108, %v1196
      %v1198 = vpop.f32.mrf.mxu0
      %v1199 = vadd.f32 %v1108, %v1198
      %v1200 = vpop.f32.mrf.mxu0
      %v1201 = vadd.f32 %v1113, %v1200
      %v1202 = vpop.f32.mrf.mxu0
      %v1203 = vadd.f32 %v1113, %v1202
      %1204 = vmatprep.mubr.bf16.mxu0 0
      %1205 = vmatmul.mubr.bf16.gmra.mxu0 %v1155
      %v1206 = vpop.f32.mrf.mxu0
      %v1207 = vadd.f32 %v1118, %v1206
      %v1208 = vpop.f32.mrf.mxu0
      %v1209 = vadd.f32 %v1118, %v1208
      %v1210 = vpop.f32.mrf.mxu0
      %v1211 = vadd.f32 %v1123, %v1210
      %v1212 = vpop.f32.mrf.mxu0
      %v1213 = vadd.f32 %v1123, %v1212
      %1214 = vmatprep.mubr.bf16.mxu0 0
      %1215 = vmatmul.mubr.bf16.gmra.mxu0 %v1156
      %v1216 = vpop.f32.mrf.mxu0
      %v1217 = vadd.f32 %v1128, %v1216
      %v1218 = vpop.f32.mrf.mxu0
      %v1219 = vadd.f32 %v1128, %v1218
      %v1220 = vpop.f32.mrf.mxu0
      %v1221 = vadd.f32 %v1133, %v1220
      %v1222 = vpop.f32.mrf.mxu0
      %v1223 = vadd.f32 %v1133, %v1222
      %1224 = vmatprep.mubr.bf16.mxu0 0
      %1225 = vmatmul.mubr.bf16.gmra.mxu0 %v1157
      %v1226 = vpop.f32.mrf.mxu0
      %v1227 = vadd.f32 %v1138, %v1226
      %v1228 = vpop.f32.mrf.mxu0
      %v1229 = vadd.f32 %v1138, %v1228
      %v1230 = vpop.f32.mrf.mxu0
      %v1231 = vpop.f32.mrf.mxu0
      %1232 = vdwg.mxu0
      %v1233 = vmax.f32 %v1197, 0.0
      %v1234 = vmax.f32 %v1199, 0.0
      %v1235 = vmax.f32 %v1201, 0.0
      %v1236 = vmax.f32 %v1203, 0.0
      %v1237 = vmax.f32 %v1207, 0.0
      %v1238 = vmax.f32 %v1209, 0.0
      %v1239 = vmax.f32 %v1211, 0.0
      %v1240 = vmax.f32 %v1213, 0.0
      %v1241 = vmax.f32 %v1217, 0.0
      %v1242 = vmax.f32 %v1219, 0.0
      %v1243 = vmax.f32 %v1221, 0.0
      %v1244 = vmax.f32 %v1223, 0.0
      %v1245 = vmax.f32 %v1227, 0.0
      %v1246 = vmax.f32 %v1229, 0.0
      %v1247 = vadd.f32 %v1233, %v1234
      %1248 = vadd.xlane.f32.xlu0 %v1247
      %v1249 = vpop.xlane.xlu0 %1248
      %v1250 = vadd.f32 %v1235, %v1236
      %1251 = vadd.xlane.f32.xlu0 %v1250
      %v1252 = vpop.xlane.xlu0 %1251
      %v1253 = vadd.f32 %v1237, %v1238
      %1254 = vadd.xlane.f32.xlu0 %v1253
      %v1255 = vpop.xlane.xlu0 %1254
      %v1256 = vadd.f32 %v1239, %v1240
      %1257 = vadd.xlane.f32.xlu0 %v1256
      %v1258 = vpop.xlane.xlu0 %1257
      %v1259 = vadd.f32 %v1241, %v1242
      %1260 = vadd.xlane.f32.xlu0 %v1259
      %v1261 = vpop.xlane.xlu0 %1260
      %v1262 = vadd.f32 %v1243, %v1244
      %1263 = vadd.xlane.f32.xlu0 %v1262
      %v1264 = vpop.xlane.xlu0 %1263
      %vm1265 = vcmask 1040384
      %v1266 = vsel %vm1265, %v1245, 0.0
      %v1267 = vsel %vm1265, %v1246, 0.0
      %v1268 = vadd.f32 %v1266, %v1267
      %1269 = vadd.xlane.f32.xlu0 %v1268
      %v1270 = vpop.xlane.xlu0 %1269
      %v1271 = vrcp.pop 256.0
      %v1272 = vmul.f32 %v1249, %v1271
      %v1273 = vmul.f32 %v1252, %v1271
      %v1274 = vmul.f32 %v1255, %v1271
      %v1275 = vmul.f32 %v1258, %v1271
      %v1276 = vmul.f32 %v1261, %v1271
      %v1277 = vmul.f32 %v1264, %v1271
      %v1278 = vmul.f32 %v1270, %v1271
      %v1279 = vld [vmem:[%s7] sm:$0xff]
      %v1280 = vld [vmem:[%s7 + $0x8] sm:$0xff]
      %v1281 = vld [vmem:[%s7 + $0x10] sm:$0xff]
      %v1282 = vld [vmem:[%s7 + $0x18] sm:$0xff]
      %v1283 = vld [vmem:[%s7 + $0x20] sm:$0xff]
      %v1284 = vld [vmem:[%s7 + $0x28] sm:$0xff]
      %v1285 = vld [vmem:[%s7 + $0x30] sm:$0x1]
      %v1286 = vmul.f32 %v1279, %v1272
      %v1287 = vmul.f32 %v1280, %v1273
      %v1288 = vmul.f32 %v1281, %v1274
      %v1289 = vmul.f32 %v1282, %v1275
      %v1290 = vmul.f32 %v1283, %v1276
      %v1291 = vmul.f32 %v1284, %v1277
      %v1292 = vmul.f32 %v1285, %v1278
      %vm1293 = vcmask 97280
      %v1294 = vsel %vm1293, %v1286, 0.0
      %v1295 = vsel %vm1293, %v1287, 0.0
      %v1296 = vadd.f32 %v1294, %v1295
      %v1297 = vsel %vm1293, %v1288, 0.0
      %v1298 = vadd.f32 %v1296, %v1297
      %v1299 = vsel %vm1293, %v1289, 0.0
      %v1300 = vadd.f32 %v1298, %v1299
      %v1301 = vsel %vm1293, %v1290, 0.0
      %v1302 = vadd.f32 %v1300, %v1301
      %v1303 = vsel %vm1293, %v1291, 0.0
      %v1304 = vadd.f32 %v1302, %v1303
      %vm1305 = vcmask 90112
      %v1306 = vsel %vm1305, %v1292, 0.0
      %v1307 = vadd.f32 %v1304, %v1306
      %v1308 = vrot.slane %v1307, 4
      %v1309 = vadd.f32 %v1307, %v1308
      %v1310 = vrot.slane %v1309, 2
      %v1311 = vadd.f32 %v1309, %v1310
      %v1312 = vrot.slane %v1311, 1
      %v1313 = vadd.f32 %v1311, %v1312
      %v1314 = vld [vmem:[%s8] sm:$0x1]
      %v1315 = vadd.f32 %v1313, %v1314
      %v1316 = vmax.f32 %v1315, 0.0
      %v1317 = vld [vmem:[%s9] sm:$0xff]
      %v1318 = vld [vmem:[%s9 + $0x8] sm:$0xff]
      %v1319 = vld [vmem:[%s9 + $0x10] sm:$0xff]
      %v1320 = vld [vmem:[%s9 + $0x18] sm:$0xff]
      %v1321 = vld [vmem:[%s9 + $0x20] sm:$0xff]
      %v1322 = vld [vmem:[%s9 + $0x28] sm:$0xff]
      %v1323 = vld [vmem:[%s9 + $0x30] sm:$0x1]
      %v1324 = vlaneseq
      %v1325 = vshrl.u32 %v1324, 7
      %v1326 = vsub.s32 0, %v1325
      %v1327 = vrot.slane %v1316, %v1326
      %v1328 = vmul.f32 %v1317, %v1327
      %v1329 = vmul.f32 %v1318, %v1327
      %v1330 = vmul.f32 %v1319, %v1327
      %v1331 = vmul.f32 %v1320, %v1327
      %v1332 = vmul.f32 %v1321, %v1327
      %v1333 = vmul.f32 %v1322, %v1327
      %v1334 = vmul.f32 %v1323, %v1327
      %v1335 = vsel %vm1293, %v1328, 0.0
      %1336 = vadd.xlane.f32.xlu0 %v1335
      %v1337 = vpop.xlane.xlu0 %1336
      %v1338 = vsel %vm1293, %v1329, 0.0
      %1339 = vadd.xlane.f32.xlu0 %v1338
      %v1340 = vpop.xlane.xlu0 %1339
      %v1341 = vsel %vm1293, %v1330, 0.0
      %1342 = vadd.xlane.f32.xlu0 %v1341
      %v1343 = vpop.xlane.xlu0 %1342
      %v1344 = vsel %vm1293, %v1331, 0.0
      %1345 = vadd.xlane.f32.xlu0 %v1344
      %v1346 = vpop.xlane.xlu0 %1345
      %v1347 = vsel %vm1293, %v1332, 0.0
      %1348 = vadd.xlane.f32.xlu0 %v1347
      %v1349 = vpop.xlane.xlu0 %1348
      %v1350 = vsel %vm1293, %v1333, 0.0
      %1351 = vadd.xlane.f32.xlu0 %v1350
      %v1352 = vpop.xlane.xlu0 %1351
      %v1353 = vsel %vm1305, %v1334, 0.0
      %1354 = vadd.xlane.f32.xlu0 %v1353
      %v1355 = vpop.xlane.xlu0 %1354
      %v1356 = vld [vmem:[%s10] sm:$0xff]
      %v1357 = vld [vmem:[%s10 + $0x8] sm:$0xff]
      %v1358 = vld [vmem:[%s10 + $0x10] sm:$0xff]
      %v1359 = vld [vmem:[%s10 + $0x18] sm:$0xff]
      %v1360 = vld [vmem:[%s10 + $0x20] sm:$0xff]
      %v1361 = vld [vmem:[%s10 + $0x28] sm:$0xff]
      %v1362 = vld [vmem:[%s10 + $0x30] sm:$0x1]
      %v1363 = vadd.f32 %v1337, %v1356
      %v1364 = vadd.f32 %v1340, %v1357
      %v1365 = vadd.f32 %v1343, %v1358
      %v1366 = vadd.f32 %v1346, %v1359
      %v1367 = vadd.f32 %v1349, %v1360
      %v1368 = vadd.f32 %v1352, %v1361
      %v1369 = vadd.f32 %v1355, %v1362
      %v1370 = vxor.u32 %v1363, 2147483648
      %v1371 = vxor.u32 %v1364, 2147483648
      %v1372 = vxor.u32 %v1365, 2147483648
      %v1373 = vxor.u32 %v1366, 2147483648
      %v1374 = vxor.u32 %v1367, 2147483648
      %v1375 = vxor.u32 %v1368, 2147483648
      %v1376 = vxor.u32 %v1369, 2147483648
      %v1377 = vmul.f32 %v1370, 1.442695
      %v1378 = vpow.pop %v1377
      %v1379 = vmul.f32 %v1371, 1.442695
      %v1380 = vpow.pop %v1379
      %v1381 = vmul.f32 %v1372, 1.442695
      %v1382 = vpow.pop %v1381
      %v1383 = vmul.f32 %v1373, 1.442695
      %v1384 = vpow.pop %v1383
      %v1385 = vmul.f32 %v1374, 1.442695
      %v1386 = vpow.pop %v1385
      %v1387 = vmul.f32 %v1375, 1.442695
      %v1388 = vpow.pop %v1387
      %v1389 = vmul.f32 %v1376, 1.442695
      %v1390 = vpow.pop %v1389
      %v1391 = vadd.f32 %v1378, 1.0
      %v1392 = vadd.f32 %v1380, 1.0
      %v1393 = vadd.f32 %v1382, 1.0
      %v1394 = vadd.f32 %v1384, 1.0
      %v1395 = vadd.f32 %v1386, 1.0
      %v1396 = vadd.f32 %v1388, 1.0
      %v1397 = vadd.f32 %v1390, 1.0
      %v1398 = vrcp.pop %v1391
      %v1399 = vmul.f32 1.0, %v1398
      %v1400 = vrcp.pop %v1392
      %v1401 = vmul.f32 1.0, %v1400
      %v1402 = vrcp.pop %v1393
      %v1403 = vmul.f32 1.0, %v1402
      %v1404 = vrcp.pop %v1394
      %v1405 = vmul.f32 1.0, %v1404
      %v1406 = vrcp.pop %v1395
      %v1407 = vmul.f32 1.0, %v1406
      %v1408 = vrcp.pop %v1396
      %v1409 = vmul.f32 1.0, %v1408
      %v1410 = vrcp.pop %v1397
      %v1411 = vmul.f32 1.0, %v1410
      %1413 = vset.pattern.permute.xlu0 0
      %1414 = vperm.xlu0 %1413, %v1399
      %v1415 = vpop.permute.xlu0 %1414
      %1418 = vset.pattern.permute.xlu0 0
      %1419 = vperm.xlu0 %1418, %v1401
      %v1420 = vpop.permute.xlu0 %1419
      %1423 = vset.pattern.permute.xlu0 0
      %1424 = vperm.xlu0 %1423, %v1403
      %v1425 = vpop.permute.xlu0 %1424
      %1428 = vset.pattern.permute.xlu0 0
      %1429 = vperm.xlu0 %1428, %v1405
      %v1430 = vpop.permute.xlu0 %1429
      %1433 = vset.pattern.permute.xlu0 0
      %1434 = vperm.xlu0 %1433, %v1407
      %v1435 = vpop.permute.xlu0 %1434
      %1438 = vset.pattern.permute.xlu0 0
      %1439 = vperm.xlu0 %1438, %v1409
      %v1440 = vpop.permute.xlu0 %1439
      %1443 = vset.pattern.permute.xlu0 0
      %1444 = vperm.xlu0 %1443, %v1411
      %v1445 = vpop.permute.xlu0 %1444
      %v1447 = vmul.f32 %v1233, %v1415
      %v1448 = vmul.f32 %v1234, %v1415
      %v1449 = vmul.f32 %v1235, %v1420
      %v1450 = vmul.f32 %v1236, %v1420
      %v1451 = vmul.f32 %v1237, %v1425
      %v1452 = vmul.f32 %v1238, %v1425
      %v1453 = vmul.f32 %v1239, %v1430
      %v1454 = vmul.f32 %v1240, %v1430
      %v1455 = vmul.f32 %v1241, %v1435
      %v1456 = vmul.f32 %v1242, %v1435
      %v1457 = vmul.f32 %v1243, %v1440
      %v1458 = vmul.f32 %v1244, %v1440
      %v1459 = vmul.f32 %v1245, %v1445
      %v1460 = vmul.f32 %v1246, %v1445
      %1461 = vst [vmem:[%s406] sm:$0xff] %v1447
      %1462 = vst [vmem:[%s406 + $0x8] sm:$0xff] %v1448
      %1463 = vst [vmem:[%s406 + $0x10] sm:$0xff] %v1449
      %1464 = vst [vmem:[%s406 + $0x18] sm:$0xff] %v1450
      %1465 = vst [vmem:[%s406 + $0x20] sm:$0xff] %v1451
      %1466 = vst [vmem:[%s406 + $0x28] sm:$0xff] %v1452
      %1467 = vst [vmem:[%s406 + $0x30] sm:$0xff] %v1453
      %1468 = vst [vmem:[%s406 + $0x38] sm:$0xff] %v1454
      %1469 = vst [vmem:[%s406 + $0x40] sm:$0xff] %v1455
      %1470 = vst [vmem:[%s406 + $0x48] sm:$0xff] %v1456
      %1471 = vst [vmem:[%s406 + $0x50] sm:$0xff] %v1457
      %1472 = vst [vmem:[%s406 + $0x58] sm:$0xff] %v1458
      %1473 = vst [vmem:[%s406 + $0x60] sm:$0x1] %v1459
      %1474 = vst [vmem:[%s406 + $0x68] sm:$0x1] %v1460
      %p1475 = scmp.lt.s32.totalorder %s22, 1
      %s1476 = scalar_select %p1475, %s22, 1
      %s1477 = smul.addr %s1476, 14
      %s1478 = smul.addr %s1477, 8
      %s1479 = scalar_lea.vmem %s11, %s1478
      // Predicated region
      $region65: #{tpu_custom_call.1} parent=63 // pred_check
        %p1480 = pneg %p281
      $region66: #{tpu_custom_call.1} parent=63 // pred_check_branch
        %1482 = sbr.rel (%p1480) target = $region68
      $region67: #{tpu_custom_call.1} parent=63 // pred_region
        _
      $region68: #{tpu_custom_call.1} parent=63 // pred_fallthru
        _
    $region64: #{tpu_custom_call.1} parent=5 // pred_fallthru
      _
    %p1483 = scmp.le.s32.totalorder 2, %s17
    // Predicated region
    $region69: #{tpu_custom_call.1} parent=5 // pred_check
      %p1484 = pneg %p1483
    $region70: #{tpu_custom_call.1} parent=5 // pred_check_branch
      %1486 = sbr.rel (%p1484) target = $region72
    $region71: #{tpu_custom_call.1} parent=5 // pred_region
      %s1487 = ssub.s32 %s17, 2
      // Predicated region
      $region73: #{tpu_custom_call.1} parent=71 // pred_check
        %p1488 = pneg %p287
      $region74: #{tpu_custom_call.1} parent=71 // pred_check_branch
        %1490 = sbr.rel (%p1488) target = $region76
      $region75: #{tpu_custom_call.1} parent=71 // pred_region
        %p1491 = scmp.lt.s32.totalorder %s23, 1
        %s1492 = scalar_select %p1491, %s23, 1
        %s1493 = smul.addr %s1492, 14
        %s1494 = smul.addr %s1493, 8
        %s1495 = scalar_lea.vmem %s11, %s1494
      $region76: #{tpu_custom_call.1} parent=71 // pred_fallthru
        _
    $region72: #{tpu_custom_call.1} parent=5 // pred_fallthru
      _
  $region6: #{tpu_custom_call.1} parent=0 // loop_footer
    %s21 = sadd.s32 1, %s17
  $region7: #{tpu_custom_call.1} parent=0 // loop_footer_branch
    %16 = sbr.rel target = $region3
  $region8: #{tpu_custom_call.1} parent=0 // loop_exit
    _

</llo_original>
